<compile_context>
chip_gen: v5e
topology: v5e:2x2
jax: 0.10.0
libtpu: 0.0.40
codegen_flags: <defaults>
</compile_context>

<pallas_src>
import math
import numpy as np

import jax
import jax.numpy as jnp
from jax.experimental import pallas as pl
from jax.experimental.pallas import tpu as pltpu

D_MODEL = 64
N_HEAD = 2
HEAD_DIM = D_MODEL // N_HEAD
N_LAYERS = 2
D_FF = 128
D_HID = 32
D_OUT = 16
LN_EPS = 1e-5

# packed weight slab: rows [0:64)=w_qkv, [64:128)=w_out, [128:192)=w_ff1, [192:320)=w_ff2
W_ROWS = 3 * D_MODEL + D_FF          # 320
W_COLS = 3 * D_MODEL                 # 192
# packed head slab: row 0 = we, row 1 = b_h1, row 2 = b_h2, rows [8:72)=w_h1, [72:136)=w_h2
HEAD_ROWS = 8 + 2 * D_MODEL          # 136


# ----------------------------- kernel helpers -----------------------------
def _gelu_tanh(x):
    # tanh-form GELU; tanh lowers to the EUP (error ~3e-4 vs exact erf form)
    c = math.sqrt(2.0 / math.pi)
    return 0.5 * x * (1.0 + jnp.tanh(c * (x + 0.044715 * x * x * x)))


def _layer_norm(x, gamma, beta):
    mu = jnp.mean(x, axis=-1, keepdims=True)
    var = jnp.mean(jnp.square(x - mu), axis=-1, keepdims=True)
    return (x - mu) * jax.lax.rsqrt(var + LN_EPS) * gamma + beta


def _dot(a, b):
    return jnp.dot(a, b, preferred_element_type=jnp.float32)


def _dot_nt(a, b):  # a @ b.T without materializing a transpose
    return jax.lax.dot_general(a, b, (((1,), (1,)), ((), ())),
                               preferred_element_type=jnp.float32)


# --------------------------------- kernel ---------------------------------
def frame_transformer_kernel(
    x_ref,       # (1, S, 1)          this batch's scalar frame values
    pe_ref,      # (S, D)             positional encoding + embed bias (f32)
    w_ref,       # (L, 320, 192)      bf16 packed [w_qkv | w_out | w_ff1 | w_ff2]
    vecs_ref,    # (L, 8, 192)        f32 packed biases / LN vectors
    head_ref,    # (136, 64)          f32 packed [we, b_h1, b_h2, w_h1, w_h2]
    out_ref,     # (1, 1, 16)
):
    D = D_MODEL
    F = D_FF
    bf16 = jnp.bfloat16
    scale = 1.0 / math.sqrt(HEAD_DIM)

    # embed: Linear(1, D) on the scalar frame value + PE (+ embed bias folded in)
    we = head_ref[0:1, :]                                   # (1, D)
    h = x_ref[0] * we + pe_ref[...]                         # (S, D) f32

    # per-head lane masks: head hd occupies lanes [hd*HD, (hd+1)*HD)
    lane = jax.lax.broadcasted_iota(jnp.int32, (1, D), 1)
    head_masks = [
        ((lane >= hd * HEAD_DIM) & (lane < (hd + 1) * HEAD_DIM)).astype(jnp.float32)
        for hd in range(N_HEAD)
    ]

    for l in range(N_LAYERS):
        # static, sublane-aligned slices of the packed weight slab (bf16)
        w_qkv = w_ref[l, 0:D, 0:3 * D]                      # (D, 3D)
        w_out = w_ref[l, D:2 * D, 0:D]                      # (D, D)
        w_ff1 = w_ref[l, 2 * D:3 * D, 0:F]                  # (D, F)
        w_ff2 = w_ref[l, 3 * D:3 * D + F, 0:D]              # (F, D)

        b_qkv = vecs_ref[l, 0:1, 0:3 * D]                   # (1, 3D)
        b_ff1 = vecs_ref[l, 1:2, 0:F]
        b_out = vecs_ref[l, 2:3, 0:D]
        ln1_g = vecs_ref[l, 3:4, 0:D]
        ln1_b = vecs_ref[l, 4:5, 0:D]
        b_ff2 = vecs_ref[l, 5:6, 0:D]
        ln2_g = vecs_ref[l, 6:7, 0:D]
        ln2_b = vecs_ref[l, 7:8, 0:D]

        # fused Q/K/V projection: one matmul per layer (bf16 operands, f32 acc)
        qkv = _dot(h.astype(bf16), w_qkv) + b_qkv           # (S, 3D) f32
        q = qkv[:, 0:D]
        k = qkv[:, D:2 * D]
        v = qkv[:, 2 * D:3 * D]
        kb = k.astype(bf16)

        # multi-head self-attention within this batch only (no cross-batch work)
        o = None
        for m in head_masks:
            s = _dot_nt((q * m).astype(bf16), kb) * scale   # (S, S) per-head scores
            s = s - jnp.max(s, axis=-1, keepdims=True)
            p = jnp.exp(s)
            p = p * pl.reciprocal(jnp.sum(p, axis=-1, keepdims=True), approx=True)
            oh = _dot(p.astype(bf16), (v * m).astype(bf16)) # head output in its own lanes
            o = oh if o is None else o + oh                 # (S, D) concat-by-lane
        attn = _dot(o.astype(bf16), w_out) + b_out          # single out-proj per layer

        # residual + post-LN (norm_first=False default), f32
        h = _layer_norm(h + attn, ln1_g, ln1_b)

        # feed-forward with tanh-GELU
        ff = _gelu_tanh(_dot(h.astype(bf16), w_ff1) + b_ff1)
        ff = _dot(ff.astype(bf16), w_ff2) + b_ff2
        h = _layer_norm(h + ff, ln2_g, ln2_b)

    # mean over the sequence axis (sublane reduce, tiny)
    pooled = jnp.mean(h, axis=0, keepdims=True)             # (1, D)

    # output head: Linear(D,32) -> ReLU -> Linear(32,16) (zero-padded to 64 lanes)
    w_h1 = head_ref[8:8 + D, :]                             # (D, 64), cols >=32 are zero
    b_h1 = head_ref[1:2, :]                                 # (1, 64), cols >=32 are zero
    w_h2 = head_ref[8 + D:8 + 2 * D, 0:D_OUT]               # (64, 16), rows >=32 are zero
    b_h2 = head_ref[2:3, 0:D_OUT]                           # (1, 16)
    y = jnp.maximum(_dot(pooled, w_h1) + b_h1, 0.0)         # (1, 64)
    out_ref[0] = _dot(y, w_h2) + b_h2                       # (1, 16)


# ------------------------------- host glue --------------------------------
def positional_encoding(seq_len, d_model):
    position = np.arange(seq_len, dtype=np.float32)[:, None]
    div_term = np.exp(np.arange(0, d_model, 2, dtype=np.float32)
                      * (-math.log(10000.0) / (d_model // 2)))
    pe = np.zeros((seq_len, d_model), np.float32)
    pe[:, 0::2] = np.sin(position * div_term)
    pe[:, 1::2] = np.cos(position * div_term)
    return jnp.asarray(pe)


def init_params(key):
    D, F, L = D_MODEL, D_FF, N_LAYERS
    keys = iter(jax.random.split(key, 32))

    def u(shape, fan_in):
        bound = 1.0 / math.sqrt(fan_in)
        return jax.random.uniform(next(keys), shape, jnp.float32, -bound, bound)

    p = {}
    p['we'] = u((1, D), 1)                  # Linear(1, D) weight (in, out)
    p['be'] = u((1, D), 1)
    p['w_in'] = u((L, 3, D, D), D)          # q/k/v projections, (in, out)
    p['b_in'] = u((L, 3, D), D)
    p['w_out'] = u((L, D, D), D)
    p['b_out'] = u((L, D), D)
    p['ln1'] = jnp.stack([jnp.ones((L, D)), jnp.zeros((L, D))], axis=1)
    p['w_ff1'] = u((L, D, F), D)
    p['b_ff1'] = u((L, F), D)
    p['w_ff2'] = u((L, F, D), F)
    p['b_ff2'] = u((L, D), F)
    p['ln2'] = jnp.stack([jnp.ones((L, D)), jnp.zeros((L, D))], axis=1)
    p['w_h1'] = u((D, D_HID), D)
    p['b_h1'] = u((1, D_HID), D)
    p['w_h2'] = u((D_HID, D_OUT), D_HID)
    p['b_h2'] = u((1, D_OUT), D_HID)
    return p


def pack_operands(params, pe):
    """Host-side packing (pure reorganization of the same parameters)."""
    L, D, F = N_LAYERS, D_MODEL, D_FF

    # positional encoding + embed bias
    pe_be = (pe + params['be'][0]).astype(jnp.float32)                    # (S, D)

    # packed per-layer weight slab (bf16 matmul operands)
    w_qkv = jnp.transpose(params['w_in'], (0, 2, 1, 3)).reshape(L, D, 3 * D)
    w_big = jnp.zeros((L, W_ROWS, W_COLS), jnp.float32)
    w_big = w_big.at[:, 0:D, 0:3 * D].set(w_qkv)
    w_big = w_big.at[:, D:2 * D, 0:D].set(params['w_out'])
    w_big = w_big.at[:, 2 * D:3 * D, 0:F].set(params['w_ff1'])
    w_big = w_big.at[:, 3 * D:3 * D + F, 0:D].set(params['w_ff2'])
    w_big = w_big.astype(jnp.bfloat16)                                    # (L, 320, 192)

    # packed per-layer bias / LayerNorm slab (f32)
    vecs = jnp.zeros((L, 8, W_COLS), jnp.float32)
    vecs = vecs.at[:, 0, 0:3 * D].set(params['b_in'].reshape(L, 3 * D))
    vecs = vecs.at[:, 1, 0:F].set(params['b_ff1'])
    vecs = vecs.at[:, 2, 0:D].set(params['b_out'])
    vecs = vecs.at[:, 3, 0:D].set(params['ln1'][:, 0])
    vecs = vecs.at[:, 4, 0:D].set(params['ln1'][:, 1])
    vecs = vecs.at[:, 5, 0:D].set(params['b_ff2'])
    vecs = vecs.at[:, 6, 0:D].set(params['ln2'][:, 0])
    vecs = vecs.at[:, 7, 0:D].set(params['ln2'][:, 1])                    # (L, 8, 192)

    # packed embed-row + output-head slab (f32, zero-padded to 64 lanes)
    head = jnp.zeros((HEAD_ROWS, D), jnp.float32)
    head = head.at[0, :].set(params['we'][0])
    head = head.at[1, :D_HID].set(params['b_h1'][0])
    head = head.at[2, :D_OUT].set(params['b_h2'][0])
    head = head.at[8:8 + D, :D_HID].set(params['w_h1'])
    head = head.at[8 + D:8 + D + D_HID, :D_OUT].set(params['w_h2'])      # (136, 64)

    return pe_be, w_big, vecs, head


def frame_transformer_forward(x, params, pe):
    B, S = x.shape
    L = N_LAYERS
    x3 = x.reshape(B, S, 1).astype(jnp.float32)
    pe_be, w_big, vecs, head = pack_operands(params, pe)

    out = pl.pallas_call(
        frame_transformer_kernel,
        out_shape=jax.ShapeDtypeStruct((B, 1, D_OUT), jnp.float32),
        grid=(B,),
        in_specs=[
            pl.BlockSpec((1, S, 1), lambda b: (b, 0, 0)),                 # x (per-batch)
            pl.BlockSpec((S, D_MODEL), lambda b: (0, 0)),                 # pe + embed bias
            pl.BlockSpec((L, W_ROWS, W_COLS), lambda b: (0, 0, 0)),       # weight slab
            pl.BlockSpec((L, 8, W_COLS), lambda b: (0, 0, 0)),            # bias/LN slab
            pl.BlockSpec((HEAD_ROWS, D_MODEL), lambda b: (0, 0)),         # embed/head slab
        ],
        out_specs=pl.BlockSpec((1, 1, D_OUT), lambda b: (b, 0, 0)),
        compiler_params=pltpu.CompilerParams(
            dimension_semantics=("parallel",)),                           # 2 TCs on v7x
    )(x3, pe_be, w_big, vecs, head)
    return out.reshape(B, D_OUT)


# --------------------------- pure-JAX reference ----------------------------
def reference_forward(x, p, pe):
    B, S = x.shape
    D, H, HD = D_MODEL, N_HEAD, HEAD_DIM
    h = x[..., None] * p['we'][0] + p['be'][0] + pe[None, :, :]

    def ln(z, g, b):
        mu = z.mean(-1, keepdims=True)
        var = ((z - mu) ** 2).mean(-1, keepdims=True)
        return (z - mu) / jnp.sqrt(var + LN_EPS) * g + b

    for l in range(N_LAYERS):
        q = h @ p['w_in'][l, 0] + p['b_in'][l, 0]
        k = h @ p['w_in'][l, 1] + p['b_in'][l, 1]
        v = h @ p['w_in'][l, 2] + p['b_in'][l, 2]
        qh = q.reshape(B, S, H, HD).transpose(0, 2, 1, 3)
        kh = k.reshape(B, S, H, HD).transpose(0, 2, 1, 3)
        vh = v.reshape(B, S, H, HD).transpose(0, 2, 1, 3)
        scores = jnp.einsum('bhqd,bhkd->bhqk', qh, kh) / math.sqrt(HD)
        probs = jax.nn.softmax(scores, axis=-1)
        o = jnp.einsum('bhqk,bhkd->bhqd', probs, vh).transpose(0, 2, 1, 3).reshape(B, S, D)
        attn = o @ p['w_out'][l] + p['b_out'][l]
        h = ln(h + attn, p['ln1'][l, 0], p['ln1'][l, 1])
        ff = jax.nn.gelu(h @ p['w_ff1'][l] + p['b_ff1'][l], approximate=False)
        ff = ff @ p['w_ff2'][l] + p['b_ff2'][l]
        h = ln(h + ff, p['ln2'][l, 0], p['ln2'][l, 1])
    pooled = h.mean(axis=1)
    y = jnp.maximum(pooled @ p['w_h1'] + p['b_h1'][0], 0.0)
    return y @ p['w_h2'] + p['b_h2'][0]


if __name__ == "__main__":
    B, S = 2, 8
    key = jax.random.PRNGKey(0)
    kp, kx = jax.random.split(key)
    params = init_params(kp)
    x = jax.random.normal(kx, (B, S), jnp.float32)
    pe = positional_encoding(S, D_MODEL)

    out = frame_transformer_forward(x, params, pe)
    out = jax.block_until_ready(out)

    ref = reference_forward(x, params, pe)
    assert out.shape == (B, D_OUT)
    if not np.allclose(np.asarray(out), np.asarray(ref), atol=1e-2, rtol=1e-2):
        raise AssertionError("Pallas output does not match JAX reference")
    print("KERNEL_OK")
</pallas_src>

<mosaic_0001>
module attributes {stable_mosaic.version = 11 : i64} {
  func.func @frame_transformer_kernel(%arg0: i32, %arg1: memref<1x8x1xf32, #tpu.memory_space<vmem>>, %arg2: memref<8x64xf32, #tpu.memory_space<vmem>>, %arg3: memref<2x320x192xbf16, #tpu.memory_space<vmem>>, %arg4: memref<2x8x192xf32, #tpu.memory_space<vmem>>, %arg5: memref<136x64xf32, #tpu.memory_space<vmem>>, %arg6: memref<1x1x16xf32, #tpu.memory_space<vmem>>) attributes {dimension_semantics = [#tpu.dimension_semantics<parallel>], iteration_bounds = array<i64: 2>, scalar_prefetch = 0 : i64, scratch_operands = 0 : i64, tpu.core_type = #tpu.core_type<tc>, window_params = [{transform_indices = @transform_0, window_bounds = array<i64: 1, 8, 1>}, {pipeline_mode = #tpu.pipeline_mode<synchronous>, transform_indices = @transform_1, window_bounds = array<i64: 8, 64>}, {pipeline_mode = #tpu.pipeline_mode<synchronous>, transform_indices = @transform_2, window_bounds = array<i64: 2, 320, 192>}, {pipeline_mode = #tpu.pipeline_mode<synchronous>, transform_indices = @transform_3, window_bounds = array<i64: 2, 8, 192>}, {pipeline_mode = #tpu.pipeline_mode<synchronous>, transform_indices = @transform_4, window_bounds = array<i64: 136, 64>}, {transform_indices = @transform_5, window_bounds = array<i64: 1, 1, 16>}]} {
    %c0 = arith.constant 0 : index
    %c0_0 = arith.constant 0 : index
    %0 = vector.load %arg5[%c0, %c0_0] : memref<136x64xf32, #tpu.memory_space<vmem>>, vector<1x64xf32>
    %c0_1 = arith.constant 0 : index
    %c0_2 = arith.constant 0 : index
    %c0_3 = arith.constant 0 : index
    %1 = vector.load %arg1[%c0_1, %c0_2, %c0_3] : memref<1x8x1xf32, #tpu.memory_space<vmem>>, vector<1x8x1xf32>
    %2 = vector.shape_cast %1 : vector<1x8x1xf32> to vector<8x1xf32>
    %3 = vector.broadcast %2 : vector<8x1xf32> to vector<8x64xf32>
    %4 = vector.broadcast %0 : vector<1x64xf32> to vector<8x64xf32>
    %5 = arith.mulf %3, %4 : vector<8x64xf32>
    %c0_4 = arith.constant 0 : index
    %c0_5 = arith.constant 0 : index
    %6 = vector.load %arg2[%c0_4, %c0_5] : memref<8x64xf32, #tpu.memory_space<vmem>>, vector<8x64xf32>
    %7 = arith.addf %5, %6 : vector<8x64xf32>
    %8 = tpu.iota {dimensions = array<i32: 1>} : vector<1x64xi32>
    %c0_i32 = arith.constant 0 : i32
    %9 = vector.broadcast %c0_i32 : i32 to vector<1x64xi32>
    %10 = arith.cmpi sge, %8, %9 : vector<1x64xi32>
    %c32_i32 = arith.constant 32 : i32
    %11 = vector.broadcast %c32_i32 : i32 to vector<1x64xi32>
    %12 = arith.cmpi slt, %8, %11 : vector<1x64xi32>
    %13 = arith.andi %10, %12 : vector<1x64xi1>
    %14 = arith.extui %13 : vector<1x64xi1> to vector<1x64xi32>
    %15 = arith.sitofp %14 : vector<1x64xi32> to vector<1x64xf32>
    %c32_i32_6 = arith.constant 32 : i32
    %16 = vector.broadcast %c32_i32_6 : i32 to vector<1x64xi32>
    %17 = arith.cmpi sge, %8, %16 : vector<1x64xi32>
    %c64_i32 = arith.constant 64 : i32
    %18 = vector.broadcast %c64_i32 : i32 to vector<1x64xi32>
    %19 = arith.cmpi slt, %8, %18 : vector<1x64xi32>
    %20 = arith.andi %17, %19 : vector<1x64xi1>
    %21 = arith.extui %20 : vector<1x64xi1> to vector<1x64xi32>
    %22 = arith.sitofp %21 : vector<1x64xi32> to vector<1x64xf32>
    %c0_7 = arith.constant 0 : index
    %c0_8 = arith.constant 0 : index
    %c0_9 = arith.constant 0 : index
    %23 = vector.load %arg3[%c0_7, %c0_8, %c0_9] : memref<2x320x192xbf16, #tpu.memory_space<vmem>>, vector<1x64x192xbf16>
    %24 = vector.shape_cast %23 : vector<1x64x192xbf16> to vector<64x192xbf16>
    %c0_10 = arith.constant 0 : index
    %c64 = arith.constant 64 : index
    %c0_11 = arith.constant 0 : index
    %25 = vector.load %arg3[%c0_10, %c64, %c0_11] : memref<2x320x192xbf16, #tpu.memory_space<vmem>>, vector<1x64x64xbf16>
    %26 = vector.shape_cast %25 : vector<1x64x64xbf16> to vector<64x64xbf16>
    %c0_12 = arith.constant 0 : index
    %c128 = arith.constant 128 : index
    %c0_13 = arith.constant 0 : index
    %27 = vector.load %arg3[%c0_12, %c128, %c0_13] : memref<2x320x192xbf16, #tpu.memory_space<vmem>>, vector<1x64x128xbf16>
    %28 = vector.shape_cast %27 : vector<1x64x128xbf16> to vector<64x128xbf16>
    %c0_14 = arith.constant 0 : index
    %c192 = arith.constant 192 : index
    %c0_15 = arith.constant 0 : index
    %29 = vector.load %arg3[%c0_14, %c192, %c0_15] : memref<2x320x192xbf16, #tpu.memory_space<vmem>>, vector<1x128x64xbf16>
    %30 = vector.shape_cast %29 : vector<1x128x64xbf16> to vector<128x64xbf16>
    %c0_16 = arith.constant 0 : index
    %c0_17 = arith.constant 0 : index
    %c0_18 = arith.constant 0 : index
    %31 = vector.load %arg4[%c0_16, %c0_17, %c0_18] : memref<2x8x192xf32, #tpu.memory_space<vmem>>, vector<1x1x192xf32>
    %32 = vector.shape_cast %31 : vector<1x1x192xf32> to vector<1x192xf32>
    %c0_19 = arith.constant 0 : index
    %c1 = arith.constant 1 : index
    %c0_20 = arith.constant 0 : index
    %33 = vector.load %arg4[%c0_19, %c1, %c0_20] : memref<2x8x192xf32, #tpu.memory_space<vmem>>, vector<1x1x128xf32>
    %34 = vector.shape_cast %33 : vector<1x1x128xf32> to vector<1x128xf32>
    %c0_21 = arith.constant 0 : index
    %c2 = arith.constant 2 : index
    %c0_22 = arith.constant 0 : index
    %35 = vector.load %arg4[%c0_21, %c2, %c0_22] : memref<2x8x192xf32, #tpu.memory_space<vmem>>, vector<1x1x64xf32>
    %36 = vector.shape_cast %35 : vector<1x1x64xf32> to vector<1x64xf32>
    %c0_23 = arith.constant 0 : index
    %c3 = arith.constant 3 : index
    %c0_24 = arith.constant 0 : index
    %37 = vector.load %arg4[%c0_23, %c3, %c0_24] : memref<2x8x192xf32, #tpu.memory_space<vmem>>, vector<1x1x64xf32>
    %38 = vector.shape_cast %37 : vector<1x1x64xf32> to vector<1x64xf32>
    %c0_25 = arith.constant 0 : index
    %c4 = arith.constant 4 : index
    %c0_26 = arith.constant 0 : index
    %39 = vector.load %arg4[%c0_25, %c4, %c0_26] : memref<2x8x192xf32, #tpu.memory_space<vmem>>, vector<1x1x64xf32>
    %40 = vector.shape_cast %39 : vector<1x1x64xf32> to vector<1x64xf32>
    %c0_27 = arith.constant 0 : index
    %c5 = arith.constant 5 : index
    %c0_28 = arith.constant 0 : index
    %41 = vector.load %arg4[%c0_27, %c5, %c0_28] : memref<2x8x192xf32, #tpu.memory_space<vmem>>, vector<1x1x64xf32>
    %42 = vector.shape_cast %41 : vector<1x1x64xf32> to vector<1x64xf32>
    %c0_29 = arith.constant 0 : index
    %c6 = arith.constant 6 : index
    %c0_30 = arith.constant 0 : index
    %43 = vector.load %arg4[%c0_29, %c6, %c0_30] : memref<2x8x192xf32, #tpu.memory_space<vmem>>, vector<1x1x64xf32>
    %44 = vector.shape_cast %43 : vector<1x1x64xf32> to vector<1x64xf32>
    %c0_31 = arith.constant 0 : index
    %c7 = arith.constant 7 : index
    %c0_32 = arith.constant 0 : index
    %45 = vector.load %arg4[%c0_31, %c7, %c0_32] : memref<2x8x192xf32, #tpu.memory_space<vmem>>, vector<1x1x64xf32>
    %46 = vector.shape_cast %45 : vector<1x1x64xf32> to vector<1x64xf32>
    %47 = arith.truncf %7 : vector<8x64xf32> to vector<8x64xbf16>
    %cst = arith.constant dense<0.000000e+00> : vector<8x192xf32>
    %48 = tpu.matmul %47, %24, %cst {dimension_numbers = #tpu.dot_dimension_numbers<[1], [0], [0], [1], [0, 0, 1, 1], [], []>} : vector<8x64xbf16>, vector<64x192xbf16>, vector<8x192xf32> -> vector<8x192xf32>
    %49 = vector.broadcast %32 : vector<1x192xf32> to vector<8x192xf32>
    %50 = arith.addf %48, %49 : vector<8x192xf32>
    %51 = vector.extract_strided_slice %50 {offsets = [0, 0], sizes = [8, 64], strides = [1, 1]} : vector<8x192xf32> to vector<8x64xf32>
    %52 = vector.extract_strided_slice %50 {offsets = [0, 64], sizes = [8, 64], strides = [1, 1]} : vector<8x192xf32> to vector<8x64xf32>
    %53 = vector.extract_strided_slice %50 {offsets = [0, 128], sizes = [8, 64], strides = [1, 1]} : vector<8x192xf32> to vector<8x64xf32>
    %54 = arith.truncf %52 : vector<8x64xf32> to vector<8x64xbf16>
    %55 = vector.broadcast %15 : vector<1x64xf32> to vector<8x64xf32>
    %56 = arith.mulf %51, %55 : vector<8x64xf32>
    %57 = arith.truncf %56 : vector<8x64xf32> to vector<8x64xbf16>
    %cst_33 = arith.constant dense<0.000000e+00> : vector<8x8xf32>
    %58 = tpu.matmul %57, %54, %cst_33 {dimension_numbers = #tpu.dot_dimension_numbers<[1], [1], [0], [0], [0, 0, 1, 0], [], []>} : vector<8x64xbf16>, vector<8x64xbf16>, vector<8x8xf32> -> vector<8x8xf32>
    %cst_34 = arith.constant 0.176776692 : f32
    %59 = vector.broadcast %cst_34 : f32 to vector<8x8xf32>
    %60 = arith.mulf %58, %59 : vector<8x8xf32>
    %cst_35 = arith.constant dense<0xFF800000> : vector<8xf32>
    %61 = vector.multi_reduction <maximumf>, %60, %cst_35 [1] : vector<8x8xf32> to vector<8xf32>
    %62 = vector.shape_cast %61 : vector<8xf32> to vector<8x1xf32>
    %63 = vector.broadcast %62 : vector<8x1xf32> to vector<8x8xf32>
    %64 = arith.subf %60, %63 : vector<8x8xf32>
    %65 = math.exp %64 : vector<8x8xf32>
    %cst_36 = arith.constant dense<0.000000e+00> : vector<8xf32>
    %66 = vector.multi_reduction <add>, %65, %cst_36 [1] : vector<8x8xf32> to vector<8xf32>
    %67 = vector.shape_cast %66 : vector<8xf32> to vector<8x1xf32>
    %68 = tpu.reciprocal %67 {approx = true} : vector<8x1xf32> -> vector<8x1xf32>
    %69 = vector.broadcast %68 : vector<8x1xf32> to vector<8x8xf32>
    %70 = arith.mulf %65, %69 : vector<8x8xf32>
    %71 = arith.truncf %70 : vector<8x8xf32> to vector<8x8xbf16>
    %72 = vector.broadcast %15 : vector<1x64xf32> to vector<8x64xf32>
    %73 = arith.mulf %53, %72 : vector<8x64xf32>
    %74 = arith.truncf %73 : vector<8x64xf32> to vector<8x64xbf16>
    %cst_37 = arith.constant dense<0.000000e+00> : vector<8x64xf32>
    %75 = tpu.matmul %71, %74, %cst_37 {dimension_numbers = #tpu.dot_dimension_numbers<[1], [0], [0], [1], [0, 0, 1, 1], [], []>} : vector<8x8xbf16>, vector<8x64xbf16>, vector<8x64xf32> -> vector<8x64xf32>
    %76 = vector.broadcast %22 : vector<1x64xf32> to vector<8x64xf32>
    %77 = arith.mulf %51, %76 : vector<8x64xf32>
    %78 = arith.truncf %77 : vector<8x64xf32> to vector<8x64xbf16>
    %cst_38 = arith.constant dense<0.000000e+00> : vector<8x8xf32>
    %79 = tpu.matmul %78, %54, %cst_38 {dimension_numbers = #tpu.dot_dimension_numbers<[1], [1], [0], [0], [0, 0, 1, 0], [], []>} : vector<8x64xbf16>, vector<8x64xbf16>, vector<8x8xf32> -> vector<8x8xf32>
    %cst_39 = arith.constant 0.176776692 : f32
    %80 = vector.broadcast %cst_39 : f32 to vector<8x8xf32>
    %81 = arith.mulf %79, %80 : vector<8x8xf32>
    %cst_40 = arith.constant dense<0xFF800000> : vector<8xf32>
    %82 = vector.multi_reduction <maximumf>, %81, %cst_40 [1] : vector<8x8xf32> to vector<8xf32>
    %83 = vector.shape_cast %82 : vector<8xf32> to vector<8x1xf32>
    %84 = vector.broadcast %83 : vector<8x1xf32> to vector<8x8xf32>
    %85 = arith.subf %81, %84 : vector<8x8xf32>
    %86 = math.exp %85 : vector<8x8xf32>
    %cst_41 = arith.constant dense<0.000000e+00> : vector<8xf32>
    %87 = vector.multi_reduction <add>, %86, %cst_41 [1] : vector<8x8xf32> to vector<8xf32>
    %88 = vector.shape_cast %87 : vector<8xf32> to vector<8x1xf32>
    %89 = tpu.reciprocal %88 {approx = true} : vector<8x1xf32> -> vector<8x1xf32>
    %90 = vector.broadcast %89 : vector<8x1xf32> to vector<8x8xf32>
    %91 = arith.mulf %86, %90 : vector<8x8xf32>
    %92 = arith.truncf %91 : vector<8x8xf32> to vector<8x8xbf16>
    %93 = vector.broadcast %22 : vector<1x64xf32> to vector<8x64xf32>
    %94 = arith.mulf %53, %93 : vector<8x64xf32>
    %95 = arith.truncf %94 : vector<8x64xf32> to vector<8x64xbf16>
    %cst_42 = arith.constant dense<0.000000e+00> : vector<8x64xf32>
    %96 = tpu.matmul %92, %95, %cst_42 {dimension_numbers = #tpu.dot_dimension_numbers<[1], [0], [0], [1], [0, 0, 1, 1], [], []>} : vector<8x8xbf16>, vector<8x64xbf16>, vector<8x64xf32> -> vector<8x64xf32>
    %97 = arith.addf %75, %96 : vector<8x64xf32>
    %98 = arith.truncf %97 : vector<8x64xf32> to vector<8x64xbf16>
    %cst_43 = arith.constant dense<0.000000e+00> : vector<8x64xf32>
    %99 = tpu.matmul %98, %26, %cst_43 {dimension_numbers = #tpu.dot_dimension_numbers<[1], [0], [0], [1], [0, 0, 1, 1], [], []>} : vector<8x64xbf16>, vector<64x64xbf16>, vector<8x64xf32> -> vector<8x64xf32>
    %100 = vector.broadcast %36 : vector<1x64xf32> to vector<8x64xf32>
    %101 = arith.addf %99, %100 : vector<8x64xf32>
    %102 = arith.addf %7, %101 : vector<8x64xf32>
    %cst_44 = arith.constant dense<0.000000e+00> : vector<8xf32>
    %103 = vector.multi_reduction <add>, %102, %cst_44 [1] : vector<8x64xf32> to vector<8xf32>
    %104 = vector.shape_cast %103 : vector<8xf32> to vector<8x1xf32>
    %cst_45 = arith.constant 6.400000e+01 : f32
    %105 = vector.broadcast %cst_45 : f32 to vector<8x1xf32>
    %106 = arith.divf %104, %105 : vector<8x1xf32>
    %107 = vector.broadcast %106 : vector<8x1xf32> to vector<8x64xf32>
    %108 = arith.subf %102, %107 : vector<8x64xf32>
    %109 = arith.mulf %108, %108 : vector<8x64xf32>
    %cst_46 = arith.constant dense<0.000000e+00> : vector<8xf32>
    %110 = vector.multi_reduction <add>, %109, %cst_46 [1] : vector<8x64xf32> to vector<8xf32>
    %111 = vector.shape_cast %110 : vector<8xf32> to vector<8x1xf32>
    %cst_47 = arith.constant 6.400000e+01 : f32
    %112 = vector.broadcast %cst_47 : f32 to vector<8x1xf32>
    %113 = arith.divf %111, %112 : vector<8x1xf32>
    %114 = vector.broadcast %106 : vector<8x1xf32> to vector<8x64xf32>
    %115 = arith.subf %102, %114 : vector<8x64xf32>
    %cst_48 = arith.constant 9.99999974E-6 : f32
    %116 = vector.broadcast %cst_48 : f32 to vector<8x1xf32>
    %117 = arith.addf %113, %116 : vector<8x1xf32>
    %118 = math.rsqrt %117 : vector<8x1xf32>
    %119 = vector.broadcast %118 : vector<8x1xf32> to vector<8x64xf32>
    %120 = arith.mulf %115, %119 : vector<8x64xf32>
    %121 = vector.broadcast %38 : vector<1x64xf32> to vector<8x64xf32>
    %122 = arith.mulf %120, %121 : vector<8x64xf32>
    %123 = vector.broadcast %40 : vector<1x64xf32> to vector<8x64xf32>
    %124 = arith.addf %122, %123 : vector<8x64xf32>
    %125 = arith.truncf %124 : vector<8x64xf32> to vector<8x64xbf16>
    %cst_49 = arith.constant dense<0.000000e+00> : vector<8x128xf32>
    %126 = tpu.matmul %125, %28, %cst_49 {dimension_numbers = #tpu.dot_dimension_numbers<[1], [0], [0], [1], [0, 0, 1, 1], [], []>} : vector<8x64xbf16>, vector<64x128xbf16>, vector<8x128xf32> -> vector<8x128xf32>
    %127 = vector.broadcast %34 : vector<1x128xf32> to vector<8x128xf32>
    %128 = arith.addf %126, %127 : vector<8x128xf32>
    %cst_50 = arith.constant 5.000000e-01 : f32
    %129 = vector.broadcast %cst_50 : f32 to vector<8x128xf32>
    %130 = arith.mulf %129, %128 : vector<8x128xf32>
    %cst_51 = arith.constant 4.471500e-02 : f32
    %131 = vector.broadcast %cst_51 : f32 to vector<8x128xf32>
    %132 = arith.mulf %131, %128 : vector<8x128xf32>
    %133 = arith.mulf %132, %128 : vector<8x128xf32>
    %134 = arith.mulf %133, %128 : vector<8x128xf32>
    %135 = arith.addf %128, %134 : vector<8x128xf32>
    %cst_52 = arith.constant 0.797884583 : f32
    %136 = vector.broadcast %cst_52 : f32 to vector<8x128xf32>
    %137 = arith.mulf %136, %135 : vector<8x128xf32>
    %138 = math.tanh %137 : vector<8x128xf32>
    %cst_53 = arith.constant 1.000000e+00 : f32
    %139 = vector.broadcast %cst_53 : f32 to vector<8x128xf32>
    %140 = arith.addf %139, %138 : vector<8x128xf32>
    %141 = arith.mulf %130, %140 : vector<8x128xf32>
    %142 = arith.truncf %141 : vector<8x128xf32> to vector<8x128xbf16>
    %cst_54 = arith.constant dense<0.000000e+00> : vector<8x64xf32>
    %143 = tpu.matmul %142, %30, %cst_54 {dimension_numbers = #tpu.dot_dimension_numbers<[1], [0], [0], [1], [0, 0, 1, 1], [], []>} : vector<8x128xbf16>, vector<128x64xbf16>, vector<8x64xf32> -> vector<8x64xf32>
    %144 = vector.broadcast %42 : vector<1x64xf32> to vector<8x64xf32>
    %145 = arith.addf %143, %144 : vector<8x64xf32>
    %146 = arith.addf %124, %145 : vector<8x64xf32>
    %cst_55 = arith.constant dense<0.000000e+00> : vector<8xf32>
    %147 = vector.multi_reduction <add>, %146, %cst_55 [1] : vector<8x64xf32> to vector<8xf32>
    %148 = vector.shape_cast %147 : vector<8xf32> to vector<8x1xf32>
    %cst_56 = arith.constant 6.400000e+01 : f32
    %149 = vector.broadcast %cst_56 : f32 to vector<8x1xf32>
    %150 = arith.divf %148, %149 : vector<8x1xf32>
    %151 = vector.broadcast %150 : vector<8x1xf32> to vector<8x64xf32>
    %152 = arith.subf %146, %151 : vector<8x64xf32>
    %153 = arith.mulf %152, %152 : vector<8x64xf32>
    %cst_57 = arith.constant dense<0.000000e+00> : vector<8xf32>
    %154 = vector.multi_reduction <add>, %153, %cst_57 [1] : vector<8x64xf32> to vector<8xf32>
    %155 = vector.shape_cast %154 : vector<8xf32> to vector<8x1xf32>
    %cst_58 = arith.constant 6.400000e+01 : f32
    %156 = vector.broadcast %cst_58 : f32 to vector<8x1xf32>
    %157 = arith.divf %155, %156 : vector<8x1xf32>
    %158 = vector.broadcast %150 : vector<8x1xf32> to vector<8x64xf32>
    %159 = arith.subf %146, %158 : vector<8x64xf32>
    %cst_59 = arith.constant 9.99999974E-6 : f32
    %160 = vector.broadcast %cst_59 : f32 to vector<8x1xf32>
    %161 = arith.addf %157, %160 : vector<8x1xf32>
    %162 = math.rsqrt %161 : vector<8x1xf32>
    %163 = vector.broadcast %162 : vector<8x1xf32> to vector<8x64xf32>
    %164 = arith.mulf %159, %163 : vector<8x64xf32>
    %165 = vector.broadcast %44 : vector<1x64xf32> to vector<8x64xf32>
    %166 = arith.mulf %164, %165 : vector<8x64xf32>
    %167 = vector.broadcast %46 : vector<1x64xf32> to vector<8x64xf32>
    %168 = arith.addf %166, %167 : vector<8x64xf32>
    %c1_60 = arith.constant 1 : index
    %c0_61 = arith.constant 0 : index
    %c0_62 = arith.constant 0 : index
    %169 = vector.load %arg3[%c1_60, %c0_61, %c0_62] : memref<2x320x192xbf16, #tpu.memory_space<vmem>>, vector<1x64x192xbf16>
    %170 = vector.shape_cast %169 : vector<1x64x192xbf16> to vector<64x192xbf16>
    %c1_63 = arith.constant 1 : index
    %c64_64 = arith.constant 64 : index
    %c0_65 = arith.constant 0 : index
    %171 = vector.load %arg3[%c1_63, %c64_64, %c0_65] : memref<2x320x192xbf16, #tpu.memory_space<vmem>>, vector<1x64x64xbf16>
    %172 = vector.shape_cast %171 : vector<1x64x64xbf16> to vector<64x64xbf16>
    %c1_66 = arith.constant 1 : index
    %c128_67 = arith.constant 128 : index
    %c0_68 = arith.constant 0 : index
    %173 = vector.load %arg3[%c1_66, %c128_67, %c0_68] : memref<2x320x192xbf16, #tpu.memory_space<vmem>>, vector<1x64x128xbf16>
    %174 = vector.shape_cast %173 : vector<1x64x128xbf16> to vector<64x128xbf16>
    %c1_69 = arith.constant 1 : index
    %c192_70 = arith.constant 192 : index
    %c0_71 = arith.constant 0 : index
    %175 = vector.load %arg3[%c1_69, %c192_70, %c0_71] : memref<2x320x192xbf16, #tpu.memory_space<vmem>>, vector<1x128x64xbf16>
    %176 = vector.shape_cast %175 : vector<1x128x64xbf16> to vector<128x64xbf16>
    %c1_72 = arith.constant 1 : index
    %c0_73 = arith.constant 0 : index
    %c0_74 = arith.constant 0 : index
    %177 = vector.load %arg4[%c1_72, %c0_73, %c0_74] : memref<2x8x192xf32, #tpu.memory_space<vmem>>, vector<1x1x192xf32>
    %178 = vector.shape_cast %177 : vector<1x1x192xf32> to vector<1x192xf32>
    %c1_75 = arith.constant 1 : index
    %c1_76 = arith.constant 1 : index
    %c0_77 = arith.constant 0 : index
    %179 = vector.load %arg4[%c1_75, %c1_76, %c0_77] : memref<2x8x192xf32, #tpu.memory_space<vmem>>, vector<1x1x128xf32>
    %180 = vector.shape_cast %179 : vector<1x1x128xf32> to vector<1x128xf32>
    %c1_78 = arith.constant 1 : index
    %c2_79 = arith.constant 2 : index
    %c0_80 = arith.constant 0 : index
    %181 = vector.load %arg4[%c1_78, %c2_79, %c0_80] : memref<2x8x192xf32, #tpu.memory_space<vmem>>, vector<1x1x64xf32>
    %182 = vector.shape_cast %181 : vector<1x1x64xf32> to vector<1x64xf32>
    %c1_81 = arith.constant 1 : index
    %c3_82 = arith.constant 3 : index
    %c0_83 = arith.constant 0 : index
    %183 = vector.load %arg4[%c1_81, %c3_82, %c0_83] : memref<2x8x192xf32, #tpu.memory_space<vmem>>, vector<1x1x64xf32>
    %184 = vector.shape_cast %183 : vector<1x1x64xf32> to vector<1x64xf32>
    %c1_84 = arith.constant 1 : index
    %c4_85 = arith.constant 4 : index
    %c0_86 = arith.constant 0 : index
    %185 = vector.load %arg4[%c1_84, %c4_85, %c0_86] : memref<2x8x192xf32, #tpu.memory_space<vmem>>, vector<1x1x64xf32>
    %186 = vector.shape_cast %185 : vector<1x1x64xf32> to vector<1x64xf32>
    %c1_87 = arith.constant 1 : index
    %c5_88 = arith.constant 5 : index
    %c0_89 = arith.constant 0 : index
    %187 = vector.load %arg4[%c1_87, %c5_88, %c0_89] : memref<2x8x192xf32, #tpu.memory_space<vmem>>, vector<1x1x64xf32>
    %188 = vector.shape_cast %187 : vector<1x1x64xf32> to vector<1x64xf32>
    %c1_90 = arith.constant 1 : index
    %c6_91 = arith.constant 6 : index
    %c0_92 = arith.constant 0 : index
    %189 = vector.load %arg4[%c1_90, %c6_91, %c0_92] : memref<2x8x192xf32, #tpu.memory_space<vmem>>, vector<1x1x64xf32>
    %190 = vector.shape_cast %189 : vector<1x1x64xf32> to vector<1x64xf32>
    %c1_93 = arith.constant 1 : index
    %c7_94 = arith.constant 7 : index
    %c0_95 = arith.constant 0 : index
    %191 = vector.load %arg4[%c1_93, %c7_94, %c0_95] : memref<2x8x192xf32, #tpu.memory_space<vmem>>, vector<1x1x64xf32>
    %192 = vector.shape_cast %191 : vector<1x1x64xf32> to vector<1x64xf32>
    %193 = arith.truncf %168 : vector<8x64xf32> to vector<8x64xbf16>
    %cst_96 = arith.constant dense<0.000000e+00> : vector<8x192xf32>
    %194 = tpu.matmul %193, %170, %cst_96 {dimension_numbers = #tpu.dot_dimension_numbers<[1], [0], [0], [1], [0, 0, 1, 1], [], []>} : vector<8x64xbf16>, vector<64x192xbf16>, vector<8x192xf32> -> vector<8x192xf32>
    %195 = vector.broadcast %178 : vector<1x192xf32> to vector<8x192xf32>
    %196 = arith.addf %194, %195 : vector<8x192xf32>
    %197 = vector.extract_strided_slice %196 {offsets = [0, 0], sizes = [8, 64], strides = [1, 1]} : vector<8x192xf32> to vector<8x64xf32>
    %198 = vector.extract_strided_slice %196 {offsets = [0, 64], sizes = [8, 64], strides = [1, 1]} : vector<8x192xf32> to vector<8x64xf32>
    %199 = vector.extract_strided_slice %196 {offsets = [0, 128], sizes = [8, 64], strides = [1, 1]} : vector<8x192xf32> to vector<8x64xf32>
    %200 = arith.truncf %198 : vector<8x64xf32> to vector<8x64xbf16>
    %201 = vector.broadcast %15 : vector<1x64xf32> to vector<8x64xf32>
    %202 = arith.mulf %197, %201 : vector<8x64xf32>
    %203 = arith.truncf %202 : vector<8x64xf32> to vector<8x64xbf16>
    %cst_97 = arith.constant dense<0.000000e+00> : vector<8x8xf32>
    %204 = tpu.matmul %203, %200, %cst_97 {dimension_numbers = #tpu.dot_dimension_numbers<[1], [1], [0], [0], [0, 0, 1, 0], [], []>} : vector<8x64xbf16>, vector<8x64xbf16>, vector<8x8xf32> -> vector<8x8xf32>
    %cst_98 = arith.constant 0.176776692 : f32
    %205 = vector.broadcast %cst_98 : f32 to vector<8x8xf32>
    %206 = arith.mulf %204, %205 : vector<8x8xf32>
    %cst_99 = arith.constant dense<0xFF800000> : vector<8xf32>
    %207 = vector.multi_reduction <maximumf>, %206, %cst_99 [1] : vector<8x8xf32> to vector<8xf32>
    %208 = vector.shape_cast %207 : vector<8xf32> to vector<8x1xf32>
    %209 = vector.broadcast %208 : vector<8x1xf32> to vector<8x8xf32>
    %210 = arith.subf %206, %209 : vector<8x8xf32>
    %211 = math.exp %210 : vector<8x8xf32>
    %cst_100 = arith.constant dense<0.000000e+00> : vector<8xf32>
    %212 = vector.multi_reduction <add>, %211, %cst_100 [1] : vector<8x8xf32> to vector<8xf32>
    %213 = vector.shape_cast %212 : vector<8xf32> to vector<8x1xf32>
    %214 = tpu.reciprocal %213 {approx = true} : vector<8x1xf32> -> vector<8x1xf32>
    %215 = vector.broadcast %214 : vector<8x1xf32> to vector<8x8xf32>
    %216 = arith.mulf %211, %215 : vector<8x8xf32>
    %217 = arith.truncf %216 : vector<8x8xf32> to vector<8x8xbf16>
    %218 = vector.broadcast %15 : vector<1x64xf32> to vector<8x64xf32>
    %219 = arith.mulf %199, %218 : vector<8x64xf32>
    %220 = arith.truncf %219 : vector<8x64xf32> to vector<8x64xbf16>
    %cst_101 = arith.constant dense<0.000000e+00> : vector<8x64xf32>
    %221 = tpu.matmul %217, %220, %cst_101 {dimension_numbers = #tpu.dot_dimension_numbers<[1], [0], [0], [1], [0, 0, 1, 1], [], []>} : vector<8x8xbf16>, vector<8x64xbf16>, vector<8x64xf32> -> vector<8x64xf32>
    %222 = vector.broadcast %22 : vector<1x64xf32> to vector<8x64xf32>
    %223 = arith.mulf %197, %222 : vector<8x64xf32>
    %224 = arith.truncf %223 : vector<8x64xf32> to vector<8x64xbf16>
    %cst_102 = arith.constant dense<0.000000e+00> : vector<8x8xf32>
    %225 = tpu.matmul %224, %200, %cst_102 {dimension_numbers = #tpu.dot_dimension_numbers<[1], [1], [0], [0], [0, 0, 1, 0], [], []>} : vector<8x64xbf16>, vector<8x64xbf16>, vector<8x8xf32> -> vector<8x8xf32>
    %cst_103 = arith.constant 0.176776692 : f32
    %226 = vector.broadcast %cst_103 : f32 to vector<8x8xf32>
    %227 = arith.mulf %225, %226 : vector<8x8xf32>
    %cst_104 = arith.constant dense<0xFF800000> : vector<8xf32>
    %228 = vector.multi_reduction <maximumf>, %227, %cst_104 [1] : vector<8x8xf32> to vector<8xf32>
    %229 = vector.shape_cast %228 : vector<8xf32> to vector<8x1xf32>
    %230 = vector.broadcast %229 : vector<8x1xf32> to vector<8x8xf32>
    %231 = arith.subf %227, %230 : vector<8x8xf32>
    %232 = math.exp %231 : vector<8x8xf32>
    %cst_105 = arith.constant dense<0.000000e+00> : vector<8xf32>
    %233 = vector.multi_reduction <add>, %232, %cst_105 [1] : vector<8x8xf32> to vector<8xf32>
    %234 = vector.shape_cast %233 : vector<8xf32> to vector<8x1xf32>
    %235 = tpu.reciprocal %234 {approx = true} : vector<8x1xf32> -> vector<8x1xf32>
    %236 = vector.broadcast %235 : vector<8x1xf32> to vector<8x8xf32>
    %237 = arith.mulf %232, %236 : vector<8x8xf32>
    %238 = arith.truncf %237 : vector<8x8xf32> to vector<8x8xbf16>
    %239 = vector.broadcast %22 : vector<1x64xf32> to vector<8x64xf32>
    %240 = arith.mulf %199, %239 : vector<8x64xf32>
    %241 = arith.truncf %240 : vector<8x64xf32> to vector<8x64xbf16>
    %cst_106 = arith.constant dense<0.000000e+00> : vector<8x64xf32>
    %242 = tpu.matmul %238, %241, %cst_106 {dimension_numbers = #tpu.dot_dimension_numbers<[1], [0], [0], [1], [0, 0, 1, 1], [], []>} : vector<8x8xbf16>, vector<8x64xbf16>, vector<8x64xf32> -> vector<8x64xf32>
    %243 = arith.addf %221, %242 : vector<8x64xf32>
    %244 = arith.truncf %243 : vector<8x64xf32> to vector<8x64xbf16>
    %cst_107 = arith.constant dense<0.000000e+00> : vector<8x64xf32>
    %245 = tpu.matmul %244, %172, %cst_107 {dimension_numbers = #tpu.dot_dimension_numbers<[1], [0], [0], [1], [0, 0, 1, 1], [], []>} : vector<8x64xbf16>, vector<64x64xbf16>, vector<8x64xf32> -> vector<8x64xf32>
    %246 = vector.broadcast %182 : vector<1x64xf32> to vector<8x64xf32>
    %247 = arith.addf %245, %246 : vector<8x64xf32>
    %248 = arith.addf %168, %247 : vector<8x64xf32>
    %cst_108 = arith.constant dense<0.000000e+00> : vector<8xf32>
    %249 = vector.multi_reduction <add>, %248, %cst_108 [1] : vector<8x64xf32> to vector<8xf32>
    %250 = vector.shape_cast %249 : vector<8xf32> to vector<8x1xf32>
    %cst_109 = arith.constant 6.400000e+01 : f32
    %251 = vector.broadcast %cst_109 : f32 to vector<8x1xf32>
    %252 = arith.divf %250, %251 : vector<8x1xf32>
    %253 = vector.broadcast %252 : vector<8x1xf32> to vector<8x64xf32>
    %254 = arith.subf %248, %253 : vector<8x64xf32>
    %255 = arith.mulf %254, %254 : vector<8x64xf32>
    %cst_110 = arith.constant dense<0.000000e+00> : vector<8xf32>
    %256 = vector.multi_reduction <add>, %255, %cst_110 [1] : vector<8x64xf32> to vector<8xf32>
    %257 = vector.shape_cast %256 : vector<8xf32> to vector<8x1xf32>
    %cst_111 = arith.constant 6.400000e+01 : f32
    %258 = vector.broadcast %cst_111 : f32 to vector<8x1xf32>
    %259 = arith.divf %257, %258 : vector<8x1xf32>
    %260 = vector.broadcast %252 : vector<8x1xf32> to vector<8x64xf32>
    %261 = arith.subf %248, %260 : vector<8x64xf32>
    %cst_112 = arith.constant 9.99999974E-6 : f32
    %262 = vector.broadcast %cst_112 : f32 to vector<8x1xf32>
    %263 = arith.addf %259, %262 : vector<8x1xf32>
    %264 = math.rsqrt %263 : vector<8x1xf32>
    %265 = vector.broadcast %264 : vector<8x1xf32> to vector<8x64xf32>
    %266 = arith.mulf %261, %265 : vector<8x64xf32>
    %267 = vector.broadcast %184 : vector<1x64xf32> to vector<8x64xf32>
    %268 = arith.mulf %266, %267 : vector<8x64xf32>
    %269 = vector.broadcast %186 : vector<1x64xf32> to vector<8x64xf32>
    %270 = arith.addf %268, %269 : vector<8x64xf32>
    %271 = arith.truncf %270 : vector<8x64xf32> to vector<8x64xbf16>
    %cst_113 = arith.constant dense<0.000000e+00> : vector<8x128xf32>
    %272 = tpu.matmul %271, %174, %cst_113 {dimension_numbers = #tpu.dot_dimension_numbers<[1], [0], [0], [1], [0, 0, 1, 1], [], []>} : vector<8x64xbf16>, vector<64x128xbf16>, vector<8x128xf32> -> vector<8x128xf32>
    %273 = vector.broadcast %180 : vector<1x128xf32> to vector<8x128xf32>
    %274 = arith.addf %272, %273 : vector<8x128xf32>
    %cst_114 = arith.constant 5.000000e-01 : f32
    %275 = vector.broadcast %cst_114 : f32 to vector<8x128xf32>
    %276 = arith.mulf %275, %274 : vector<8x128xf32>
    %cst_115 = arith.constant 4.471500e-02 : f32
    %277 = vector.broadcast %cst_115 : f32 to vector<8x128xf32>
    %278 = arith.mulf %277, %274 : vector<8x128xf32>
    %279 = arith.mulf %278, %274 : vector<8x128xf32>
    %280 = arith.mulf %279, %274 : vector<8x128xf32>
    %281 = arith.addf %274, %280 : vector<8x128xf32>
    %cst_116 = arith.constant 0.797884583 : f32
    %282 = vector.broadcast %cst_116 : f32 to vector<8x128xf32>
    %283 = arith.mulf %282, %281 : vector<8x128xf32>
    %284 = math.tanh %283 : vector<8x128xf32>
    %cst_117 = arith.constant 1.000000e+00 : f32
    %285 = vector.broadcast %cst_117 : f32 to vector<8x128xf32>
    %286 = arith.addf %285, %284 : vector<8x128xf32>
    %287 = arith.mulf %276, %286 : vector<8x128xf32>
    %288 = arith.truncf %287 : vector<8x128xf32> to vector<8x128xbf16>
    %cst_118 = arith.constant dense<0.000000e+00> : vector<8x64xf32>
    %289 = tpu.matmul %288, %176, %cst_118 {dimension_numbers = #tpu.dot_dimension_numbers<[1], [0], [0], [1], [0, 0, 1, 1], [], []>} : vector<8x128xbf16>, vector<128x64xbf16>, vector<8x64xf32> -> vector<8x64xf32>
    %290 = vector.broadcast %188 : vector<1x64xf32> to vector<8x64xf32>
    %291 = arith.addf %289, %290 : vector<8x64xf32>
    %292 = arith.addf %270, %291 : vector<8x64xf32>
    %cst_119 = arith.constant dense<0.000000e+00> : vector<8xf32>
    %293 = vector.multi_reduction <add>, %292, %cst_119 [1] : vector<8x64xf32> to vector<8xf32>
    %294 = vector.shape_cast %293 : vector<8xf32> to vector<8x1xf32>
    %cst_120 = arith.constant 6.400000e+01 : f32
    %295 = vector.broadcast %cst_120 : f32 to vector<8x1xf32>
    %296 = arith.divf %294, %295 : vector<8x1xf32>
    %297 = vector.broadcast %296 : vector<8x1xf32> to vector<8x64xf32>
    %298 = arith.subf %292, %297 : vector<8x64xf32>
    %299 = arith.mulf %298, %298 : vector<8x64xf32>
    %cst_121 = arith.constant dense<0.000000e+00> : vector<8xf32>
    %300 = vector.multi_reduction <add>, %299, %cst_121 [1] : vector<8x64xf32> to vector<8xf32>
    %301 = vector.shape_cast %300 : vector<8xf32> to vector<8x1xf32>
    %cst_122 = arith.constant 6.400000e+01 : f32
    %302 = vector.broadcast %cst_122 : f32 to vector<8x1xf32>
    %303 = arith.divf %301, %302 : vector<8x1xf32>
    %304 = vector.broadcast %296 : vector<8x1xf32> to vector<8x64xf32>
    %305 = arith.subf %292, %304 : vector<8x64xf32>
    %cst_123 = arith.constant 9.99999974E-6 : f32
    %306 = vector.broadcast %cst_123 : f32 to vector<8x1xf32>
    %307 = arith.addf %303, %306 : vector<8x1xf32>
    %308 = math.rsqrt %307 : vector<8x1xf32>
    %309 = vector.broadcast %308 : vector<8x1xf32> to vector<8x64xf32>
    %310 = arith.mulf %305, %309 : vector<8x64xf32>
    %311 = vector.broadcast %190 : vector<1x64xf32> to vector<8x64xf32>
    %312 = arith.mulf %310, %311 : vector<8x64xf32>
    %313 = vector.broadcast %192 : vector<1x64xf32> to vector<8x64xf32>
    %314 = arith.addf %312, %313 : vector<8x64xf32>
    %cst_124 = arith.constant dense<0.000000e+00> : vector<64xf32>
    %315 = vector.multi_reduction <add>, %314, %cst_124 [0] : vector<8x64xf32> to vector<64xf32>
    %316 = vector.shape_cast %315 : vector<64xf32> to vector<1x64xf32>
    %cst_125 = arith.constant 8.000000e+00 : f32
    %317 = vector.broadcast %cst_125 : f32 to vector<1x64xf32>
    %318 = arith.divf %316, %317 : vector<1x64xf32>
    %c8 = arith.constant 8 : index
    %c0_126 = arith.constant 0 : index
    %319 = vector.load %arg5[%c8, %c0_126] : memref<136x64xf32, #tpu.memory_space<vmem>>, vector<64x64xf32>
    %c1_127 = arith.constant 1 : index
    %c0_128 = arith.constant 0 : index
    %320 = vector.load %arg5[%c1_127, %c0_128] : memref<136x64xf32, #tpu.memory_space<vmem>>, vector<1x64xf32>
    %c72 = arith.constant 72 : index
    %c0_129 = arith.constant 0 : index
    %321 = vector.load %arg5[%c72, %c0_129] : memref<136x64xf32, #tpu.memory_space<vmem>>, vector<64x16xf32>
    %c2_130 = arith.constant 2 : index
    %c0_131 = arith.constant 0 : index
    %322 = vector.load %arg5[%c2_130, %c0_131] : memref<136x64xf32, #tpu.memory_space<vmem>>, vector<1x16xf32>
    %cst_132 = arith.constant dense<0.000000e+00> : vector<1x64xf32>
    %323 = tpu.matmul %318, %319, %cst_132 {dimension_numbers = #tpu.dot_dimension_numbers<[1], [0], [0], [1], [0, 0, 1, 1], [], []>} : vector<1x64xf32>, vector<64x64xf32>, vector<1x64xf32> -> vector<1x64xf32>
    %324 = arith.addf %323, %320 : vector<1x64xf32>
    %cst_133 = arith.constant 0.000000e+00 : f32
    %325 = vector.broadcast %cst_133 : f32 to vector<1x64xf32>
    %326 = arith.maximumf %324, %325 : vector<1x64xf32>
    %cst_134 = arith.constant dense<0.000000e+00> : vector<1x16xf32>
    %327 = tpu.matmul %326, %321, %cst_134 {dimension_numbers = #tpu.dot_dimension_numbers<[1], [0], [0], [1], [0, 0, 1, 1], [], []>} : vector<1x64xf32>, vector<64x16xf32>, vector<1x16xf32> -> vector<1x16xf32>
    %328 = arith.addf %327, %322 : vector<1x16xf32>
    %c0_135 = arith.constant 0 : index
    %c0_136 = arith.constant 0 : index
    %c0_137 = arith.constant 0 : index
    %329 = vector.load %arg6[%c0_135, %c0_136, %c0_137] : memref<1x1x16xf32, #tpu.memory_space<vmem>>, vector<1x1x16xf32>
    %330 = vector.shape_cast %329 : vector<1x1x16xf32> to vector<1x16xf32>
    %331 = vector.shape_cast %328 : vector<1x16xf32> to vector<1x1x16xf32>
    tpu.vector_store %arg6[%c0_135, %c0_136, %c0_137], %331 {strides = array<i32>} : memref<1x1x16xf32, #tpu.memory_space<vmem>>, vector<1x1x16xf32>,
    return
  }
  func.func @transform_0(%arg0: i32) -> (i32, i32, i32) {
    %c0_i32 = arith.constant 0 : i32
    %c0_i32_0 = arith.constant 0 : i32
    %c0_i32_1 = arith.constant 0 : i32
    return %arg0, %c0_i32, %c0_i32_0 : i32, i32, i32
  }
  func.func @transform_1(%arg0: i32) -> (i32, i32) {
    %c0_i32 = arith.constant 0 : i32
    %c0_i32_0 = arith.constant 0 : i32
    %c0_i32_1 = arith.constant 0 : i32
    return %c0_i32, %c0_i32_0 : i32, i32
  }
  func.func @transform_2(%arg0: i32) -> (i32, i32, i32) {
    %c0_i32 = arith.constant 0 : i32
    %c0_i32_0 = arith.constant 0 : i32
    %c0_i32_1 = arith.constant 0 : i32
    %c0_i32_2 = arith.constant 0 : i32
    return %c0_i32, %c0_i32_0, %c0_i32_1 : i32, i32, i32
  }
  func.func @transform_3(%arg0: i32) -> (i32, i32, i32) {
    %c0_i32 = arith.constant 0 : i32
    %c0_i32_0 = arith.constant 0 : i32
    %c0_i32_1 = arith.constant 0 : i32
    %c0_i32_2 = arith.constant 0 : i32
    return %c0_i32, %c0_i32_0, %c0_i32_1 : i32, i32, i32
  }
  func.func @transform_4(%arg0: i32) -> (i32, i32) {
    %c0_i32 = arith.constant 0 : i32
    %c0_i32_0 = arith.constant 0 : i32
    %c0_i32_1 = arith.constant 0 : i32
    return %c0_i32, %c0_i32_0 : i32, i32
  }
  func.func @transform_5(%arg0: i32) -> (i32, i32, i32) {
    %c0_i32 = arith.constant 0 : i32
    %c0_i32_0 = arith.constant 0 : i32
    %c0_i32_1 = arith.constant 0 : i32
    return %arg0, %c0_i32, %c0_i32_0 : i32, i32, i32
  }
}

</mosaic_0001>

<llo_original>
// kernel: tpu_custom_call.1
$region0: #{tpu_custom_call.1}
  #allocation0 [shape = 'u32[]', space=smem, size = 0x4, offset = 0x4, fixed_abs, tag = 'smem constant byte address 0x4 - core index']
  #allocation1 [shape = 'u32[72,128]{1,0:T(1,128)}', space=vmem, size = 0x9000, scoped, tag = 'internal scratch']
  %s0 = inlined_call_operand.vmem [shape: f32[2,8,1], index: 0, kind: input, shape index: {}]
  %s1 = inlined_call_operand.vmem [shape: f32[8,64], index: 1, kind: input, shape index: {}]
  %s2 = inlined_call_operand.vmem [shape: bf16[2,320,192], index: 2, kind: input, shape index: {}]
  %s3 = inlined_call_operand.vmem [shape: f32[2,8,192], index: 3, kind: input, shape index: {}]
  %s4 = inlined_call_operand.vmem [shape: f32[136,64], index: 4, kind: input, shape index: {}]
  %s5 = inlined_call_operand.hbm [shape: f32[2,1,16], index: 5, kind: output, shape index: {}]
  %s6 = sld [smem:[#allocation0]]
  $region53: #{tpu_custom_call.1} parent=0
    _
  %s8 = ssub.s32 1, %s6
  %s9 = scalar_select 0, %s8, %s6
  $region1: #{tpu_custom_call.1} parent=0
    #allocation2 [shape = 'u8[1024]{0}', space=vmem, size = 0x400, scoped, tag = 'output window, operand 0']
    #allocation3 [shape = 's32[2]{0}', space=sflag, size = 0x8, scoped, tag = 'scoped memory for tpu_custom_call.1']
    %10 = vsyncpa [#allocation3], 0
    %s11 = scalar_lea.sflag [#allocation3], 1
    %12 = vsyncpa %s11, 0
    loop: start=0, step=1, limit=4
    $region2: #{tpu_custom_call.1} parent=1 // loop_pre_header
      _
    $region3: #{tpu_custom_call.1} parent=1 // loop_header
      %s14 = sphi 0, %s18
      %p15 = scmp.ge.s32.totalorder %s14, 4
      %s24 = sphi 0, %s26
      %s27 = sphi 0, %s24
      %s28 = sphi 0, %s27
      %s44 = sphi 0, %s28
      %s48 = sphi 0, %s48
      %s50 = sphi 0, %s48
      %s51 = sphi 0, %s50
      %s65 = sphi 0, %s51
      %s69 = sphi 0, %s69
      %s71 = sphi 0, %s69
      %s72 = sphi 0, %s71
      %s86 = sphi 0, %s72
      %s90 = sphi 0, %s90
      %s92 = sphi 0, %s90
      %s93 = sphi 0, %s92
      %s107 = sphi 0, %s93
      %s111 = sphi 0, %s111
      %s113 = sphi 0, %s111
      %s114 = sphi 0, %s113
      %s128 = sphi 0, %s114
      %s134 = sphi 0, %s136
      %s137 = sphi 0, %s134
      %s138 = sphi 0, %s137
      %s154 = sphi 0, %s138
    $region4: #{tpu_custom_call.1} parent=1 // loop_header_branch
      %17 = sbr.rel (%p15) target = $region8
    $region5: #{tpu_custom_call.1} parent=1 // loop_body
      %s19 = ssub.s32 %s14, 1
      %s20 = ssub.s32 %s14, 2
      %s21 = sadd.s32 %s14, 1
      %s22 = ssub.s32 %s14, %s21
      %p23 = scmp.eq.s32.totalorder %s22, 0
      %s25 = sadd.s32 %s24, 1
      %s26 = scalar_select %p23, %s24, %s25
      %p29 = pneg %p23
      %p30 = scmp.eq.s32.totalorder %s14, 1
      %p31 = por %p29, %p30
      %p32 = scmp.ne.s32.totalorder %s24, %s27
      %p33 = scmp.eq.s32.totalorder %s14, 0
      %p34 = por %p32, %p33
      %p35 = scmp.ne.s32.totalorder %s24, %s27
      %p36 = scmp.eq.s32.totalorder %s19, 1
      %p37 = por %p35, %p36
      %p38 = scmp.ne.s32.totalorder %s27, %s28
      %p39 = scmp.eq.s32.totalorder %s19, 0
      %p40 = por %p38, %p39
      %p41 = scmp.ne.s32.totalorder %s27, %s28
      %p42 = scmp.eq.s32.totalorder %s20, 1
      %p43 = por %p41, %p42
      %p45 = scmp.ne.s32.totalorder %s28, %s44
      %p46 = scmp.eq.s32.totalorder %s20, 0
      %p47 = por %p45, %p46
      %s49 = sadd.s32 %s48, 1
      %p52 = scmp.eq.s32.totalorder %s14, 1
      %p53 = scmp.ne.s32.totalorder %s48, %s50
      %p54 = scmp.eq.s32.totalorder %s14, 0
      %p55 = por %p53, %p54
      %p56 = scmp.ne.s32.totalorder %s48, %s50
      %p57 = scmp.eq.s32.totalorder %s19, 1
      %p58 = por %p56, %p57
      %p59 = scmp.ne.s32.totalorder %s50, %s51
      %p60 = scmp.eq.s32.totalorder %s19, 0
      %p61 = por %p59, %p60
      %p62 = scmp.ne.s32.totalorder %s50, %s51
      %p63 = scmp.eq.s32.totalorder %s20, 1
      %p64 = por %p62, %p63
      %p66 = scmp.ne.s32.totalorder %s51, %s65
      %p67 = scmp.eq.s32.totalorder %s20, 0
      %p68 = por %p66, %p67
      %s70 = sadd.s32 %s69, 1
      %p73 = scmp.eq.s32.totalorder %s14, 1
      %p74 = scmp.ne.s32.totalorder %s69, %s71
      %p75 = scmp.eq.s32.totalorder %s14, 0
      %p76 = por %p74, %p75
      %p77 = scmp.ne.s32.totalorder %s69, %s71
      %p78 = scmp.eq.s32.totalorder %s19, 1
      %p79 = por %p77, %p78
      %p80 = scmp.ne.s32.totalorder %s71, %s72
      %p81 = scmp.eq.s32.totalorder %s19, 0
      %p82 = por %p80, %p81
      %p83 = scmp.ne.s32.totalorder %s71, %s72
      %p84 = scmp.eq.s32.totalorder %s20, 1
      %p85 = por %p83, %p84
      %p87 = scmp.ne.s32.totalorder %s72, %s86
      %p88 = scmp.eq.s32.totalorder %s20, 0
      %p89 = por %p87, %p88
      %s91 = sadd.s32 %s90, 1
      %p94 = scmp.eq.s32.totalorder %s14, 1
      %p95 = scmp.ne.s32.totalorder %s90, %s92
      %p96 = scmp.eq.s32.totalorder %s14, 0
      %p97 = por %p95, %p96
      %p98 = scmp.ne.s32.totalorder %s90, %s92
      %p99 = scmp.eq.s32.totalorder %s19, 1
      %p100 = por %p98, %p99
      %p101 = scmp.ne.s32.totalorder %s92, %s93
      %p102 = scmp.eq.s32.totalorder %s19, 0
      %p103 = por %p101, %p102
      %p104 = scmp.ne.s32.totalorder %s92, %s93
      %p105 = scmp.eq.s32.totalorder %s20, 1
      %p106 = por %p104, %p105
      %p108 = scmp.ne.s32.totalorder %s93, %s107
      %p109 = scmp.eq.s32.totalorder %s20, 0
      %p110 = por %p108, %p109
      %s112 = sadd.s32 %s111, 1
      %p115 = scmp.eq.s32.totalorder %s14, 1
      %p116 = scmp.ne.s32.totalorder %s111, %s113
      %p117 = scmp.eq.s32.totalorder %s14, 0
      %p118 = por %p116, %p117
      %p119 = scmp.ne.s32.totalorder %s111, %s113
      %p120 = scmp.eq.s32.totalorder %s19, 1
      %p121 = por %p119, %p120
      %p122 = scmp.ne.s32.totalorder %s113, %s114
      %p123 = scmp.eq.s32.totalorder %s19, 0
      %p124 = por %p122, %p123
      %p125 = scmp.ne.s32.totalorder %s113, %s114
      %p126 = scmp.eq.s32.totalorder %s20, 1
      %p127 = por %p125, %p126
      %p129 = scmp.ne.s32.totalorder %s114, %s128
      %p130 = scmp.eq.s32.totalorder %s20, 0
      %p131 = por %p129, %p130
      %s132 = ssub.s32 %s14, %s21
      %p133 = scmp.eq.s32.totalorder %s132, 0
      %s135 = sadd.s32 %s134, 1
      %s136 = scalar_select %p133, %s134, %s135
      %p139 = pneg %p133
      %p140 = scmp.eq.s32.totalorder %s14, 1
      %p141 = por %p139, %p140
      %p142 = scmp.ne.s32.totalorder %s134, %s137
      %p143 = scmp.eq.s32.totalorder %s14, 0
      %p144 = por %p142, %p143
      %p145 = scmp.ne.s32.totalorder %s134, %s137
      %p146 = scmp.eq.s32.totalorder %s19, 1
      %p147 = por %p145, %p146
      %p148 = scmp.ne.s32.totalorder %s137, %s138
      %p149 = scmp.eq.s32.totalorder %s19, 0
      %p150 = por %p148, %p149
      %p151 = scmp.ne.s32.totalorder %s137, %s138
      %p152 = scmp.eq.s32.totalorder %s20, 1
      %p153 = por %p151, %p152
      %p155 = scmp.ne.s32.totalorder %s138, %s154
      %p156 = scmp.eq.s32.totalorder %s20, 0
      %p157 = por %p155, %p156
      %p158 = scmp.le.s32.totalorder 1, %s14
      %p159 = scmp.lt.s32.totalorder %s14, 3
      %p160 = pnand %p158, %p159
      %p161 = pneg %p160
      // Predicated region
      $region9: #{tpu_custom_call.1} parent=5 // pred_check
        _
      $region10: #{tpu_custom_call.1} parent=5 // pred_check_branch
        %163 = sbr.rel (%p160) target = $region12
      $region11: #{tpu_custom_call.1} parent=5 // pred_region
        %s164 = ssub.s32 %s14, 1
        // Predicated region
        $region13: #{tpu_custom_call.1} parent=11 // pred_check
          %p165 = pneg %p61
        $region14: #{tpu_custom_call.1} parent=11 // pred_check_branch
          %167 = sbr.rel (%p165) target = $region16
        $region15: #{tpu_custom_call.1} parent=11 // pred_region
          _
        $region16: #{tpu_custom_call.1} parent=11 // pred_fallthru
          _
        // Predicated region
        $region17: #{tpu_custom_call.1} parent=11 // pred_check
          %p168 = pneg %p82
        $region18: #{tpu_custom_call.1} parent=11 // pred_check_branch
          %170 = sbr.rel (%p168) target = $region20
        $region19: #{tpu_custom_call.1} parent=11 // pred_region
          _
        $region20: #{tpu_custom_call.1} parent=11 // pred_fallthru
          _
        // Predicated region
        $region21: #{tpu_custom_call.1} parent=11 // pred_check
          %p171 = pneg %p103
        $region22: #{tpu_custom_call.1} parent=11 // pred_check_branch
          %173 = sbr.rel (%p171) target = $region24
        $region23: #{tpu_custom_call.1} parent=11 // pred_region
          _
        $region24: #{tpu_custom_call.1} parent=11 // pred_fallthru
          _
        // Predicated region
        $region25: #{tpu_custom_call.1} parent=11 // pred_check
          %p174 = pneg %p124
        $region26: #{tpu_custom_call.1} parent=11 // pred_check_branch
          %176 = sbr.rel (%p174) target = $region28
        $region27: #{tpu_custom_call.1} parent=11 // pred_region
          _
        $region28: #{tpu_custom_call.1} parent=11 // pred_fallthru
          _
      $region12: #{tpu_custom_call.1} parent=5 // pred_fallthru
        _
      %p177 = scmp.lt.s32.totalorder %s14, 2
      // Predicated region
      $region29: #{tpu_custom_call.1} parent=5 // pred_check
        %p178 = pneg %p177
      $region30: #{tpu_custom_call.1} parent=5 // pred_check_branch
        %180 = sbr.rel (%p178) target = $region32
      $region31: #{tpu_custom_call.1} parent=5 // pred_region
        // Predicated region
        $region33: #{tpu_custom_call.1} parent=31 // pred_check
          %p181 = pneg %p34
        $region34: #{tpu_custom_call.1} parent=31 // pred_check_branch
          %183 = sbr.rel (%p181) target = $region36
        $region35: #{tpu_custom_call.1} parent=31 // pred_region
          %p184 = scmp.lt.s32.totalorder %s14, 1
          %s185 = scalar_select %p184, %s14, 1
          %s186 = smul.addr %s185, 8
          %s187 = scalar_lea.vmem %s0, %s186
        $region36: #{tpu_custom_call.1} parent=31 // pred_fallthru
          _
      $region32: #{tpu_custom_call.1} parent=5 // pred_fallthru
        _
      %p188 = scmp.le.s32.totalorder 1, %s14
      %p189 = scmp.lt.s32.totalorder %s14, 3
      %p190 = pnand %p188, %p189
      %p191 = pneg %p190
      // Predicated region
      $region37: #{tpu_custom_call.1} parent=5 // pred_check
        _
      $region38: #{tpu_custom_call.1} parent=5 // pred_check_branch
        %193 = sbr.rel (%p190) target = $region40
      $region39: #{tpu_custom_call.1} parent=5 // pred_region
        %s194 = ssub.s32 %s14, 1
        %p195 = scmp.lt.s32.totalorder %s19, 1
        %s196 = scalar_select %p195, %s19, 1
        %s197 = smul.addr %s196, 8
        %s198 = scalar_lea.vmem %s0, %s197
        %p199 = pneg %p40
        %p200 = pneg %p37
        %p201 = pneg %p61
        %p202 = pneg %p58
        %p203 = pneg %p82
        %p204 = pneg %p79
        %p205 = pneg %p103
        %p206 = pneg %p100
        %p207 = pneg %p124
        %p208 = pneg %p121
        %p209 = pneg %p150
        %p210 = pneg %p147
        %s211 = sand.u32 %s137, 1
        %s212 = scalar_lea.sflag [#allocation3], %s211
        %s213 = sand.u32 %s137, 1
        %s214 = scalar_lea.vmem [#allocation2], %s213
        %p215 = scmp.lt.s32.totalorder %s19, 1
        %s216 = scalar_select %p215, %s19, 1
        %s217 = smul.addr %s216, 8
        %s218 = scalar_lea.vmem %s0, %s217
        %v220 = vld [vmem:[%s4] sm:$0x1]
        %v221 = vld [vmem:[%s218] sm:$0xff]
        %223 = vset.pattern.permute.xlu0 0
        %224 = vperm.xlu0 %223, %v221
        %v225 = vpop.permute.xlu0 %224
        %v227 = vperm.slane %v220, 0
        %v228 = vmul.f32 %v225, %v227
        %v229 = vld [vmem:[%s1] sm:$0xff]
        %v230 = vadd.f32 %v228, %v229
        %v231 = vlaneseq
        %v232 = vand.u32 %v231, 127
        %vm233 = vcmp.ge.s32.totalorder %v232, 0
        %vm234 = vcmp.lt.s32.totalorder %v232, 32
        %vm235 = vmand %vm233, %vm234
        %v236 = vsel %vm235, 1, 0
        %v237 = vcvt.s32.f32 %v236
        %vm238 = vcmp.ge.s32.totalorder %v232, 32
        %vm239 = vcmp.lt.s32.totalorder %v232, 64
        %vm240 = vmand %vm238, %vm239
        %v241 = vsel %vm240, 1, 0
        %v242 = vcvt.s32.f32 %v241
        %v243 = vld [vmem:[%s2] sm:$0xff]
        %v244 = vld [vmem:[%s2 + $0x8] sm:$0xff]
        %v245 = vld [vmem:[%s2 + $0x10] sm:$0xff]
        %v246 = vld [vmem:[%s2 + $0x18] sm:$0xff]
        %v247 = vld [vmem:[%s2 + $0x20] sm:$0xff]
        %v248 = vld [vmem:[%s2 + $0x28] sm:$0xff]
        %v249 = vld [vmem:[%s2 + $0x30] sm:$0xff]
        %v250 = vld [vmem:[%s2 + $0x38] sm:$0xff]
        %v251 = vld [vmem:[%s2 + $0x40] sm:$0xf]
        %v252 = vld [vmem:[%s2 + $0x48] sm:$0xf]
        %v253 = vld [vmem:[%s2 + $0x50] sm:$0xf]
        %v254 = vld [vmem:[%s2 + $0x58] sm:$0xf]
        %v255 = vld [vmem:[%s2 + $0x60] sm:$0xf]
        %v256 = vld [vmem:[%s2 + $0x68] sm:$0xf]
        %v257 = vld [vmem:[%s2 + $0x70] sm:$0xf]
        %v258 = vld [vmem:[%s2 + $0x78] sm:$0xf]
        %v259 = vld [vmem:[%s2 + $0x80] sm:$0xf]
        %v260 = vld [vmem:[%s2 + $0x88] sm:$0xf]
        %v261 = vld [vmem:[%s2 + $0x90] sm:$0xf]
        %v262 = vld [vmem:[%s2 + $0x98] sm:$0xf]
        %v263 = vld [vmem:[%s2 + $0xa0] sm:$0xf]
        %v264 = vld [vmem:[%s2 + $0xa8] sm:$0xf]
        %v265 = vld [vmem:[%s2 + $0xb0] sm:$0xf]
        %v266 = vld [vmem:[%s2 + $0xb8] sm:$0xf]
        %v267 = vld [vmem:[%s2 + $0xc0] sm:$0xf]
        %v268 = vld [vmem:[%s2 + $0xc8] sm:$0xf]
        %v269 = vld [vmem:[%s2 + $0xd0] sm:$0xf]
        %v270 = vld [vmem:[%s2 + $0xd8] sm:$0xf]
        %v271 = vld [vmem:[%s2 + $0xe0] sm:$0xf]
        %v272 = vld [vmem:[%s2 + $0xe8] sm:$0xf]
        %v273 = vld [vmem:[%s2 + $0xf0] sm:$0xf]
        %v274 = vld [vmem:[%s2 + $0xf8] sm:$0xf]
        %v275 = vld [vmem:[%s2 + $0x100] sm:$0xf]
        %v276 = vld [vmem:[%s2 + $0x108] sm:$0xf]
        %v277 = vld [vmem:[%s2 + $0x110] sm:$0xf]
        %v278 = vld [vmem:[%s2 + $0x118] sm:$0xf]
        %v279 = vld [vmem:[%s2 + $0x120] sm:$0xf]
        %v280 = vld [vmem:[%s2 + $0x128] sm:$0xf]
        %v281 = vld [vmem:[%s2 + $0x130] sm:$0xf]
        %v282 = vld [vmem:[%s2 + $0x138] sm:$0xf]
        %v283 = vld [vmem:[%s3] ss:$8 sm:$0x3]
        %v284 = vld [vmem:[%s3 + $0x1] ss:$0 sm:$0xff]
        %v285 = vld [vmem:[%s3 + $0x2] ss:$0 sm:$0xff]
        %v286 = vld [vmem:[%s3 + $0x3] ss:$0 sm:$0xff]
        %v287 = vld [vmem:[%s3 + $0x4] ss:$0 sm:$0xff]
        %v288 = vld [vmem:[%s3 + $0x5] ss:$0 sm:$0xff]
        %v289 = vld [vmem:[%s3 + $0x6] ss:$0 sm:$0xff]
        %v290 = vld [vmem:[%s3 + $0x7] ss:$0 sm:$0xff]
        %v291 = vpack.c.bf16 %v230, %v230
        %v293 = vperm.slane %v283, 0
        %v294 = vperm.slane %v283, 1
        %v305 = vunpack.c.l.b16 %v243
        %v306 = vunpack.c.h.b16 %v243
        %v307 = vunpack.c.l.b16 %v244
        %v308 = vunpack.c.h.b16 %v244
        %v309 = vunpack.c.l.b16 %v245
        %v310 = vunpack.c.h.b16 %v245
        %v311 = vunpack.c.l.b16 %v246
        %v312 = vunpack.c.h.b16 %v246
        %v313 = vunpack.c.l.b16 %v247
        %v314 = vunpack.c.h.b16 %v247
        %v315 = vunpack.c.l.b16 %v248
        %v316 = vunpack.c.h.b16 %v248
        %v317 = vunpack.c.l.b16 %v249
        %v318 = vunpack.c.h.b16 %v249
        %v319 = vunpack.c.l.b16 %v250
        %v320 = vunpack.c.h.b16 %v250
        %v321 = vpack.c.b16 %v307, %v305
        %v322 = vpack.c.b16 %v308, %v306
        %v323 = vpack.c.b16 %v311, %v309
        %v324 = vpack.c.b16 %v312, %v310
        %v325 = vpack.c.b16 %v315, %v313
        %v326 = vpack.c.b16 %v316, %v314
        %v327 = vpack.c.b16 %v319, %v317
        %v328 = vpack.c.b16 %v320, %v318
        %vm337 = vcmask 523264
        %v339 = vsel %vm337, %v291, 0
        %341 = vmatpush.bf16.msra.mxu0 0
        %342 = vmatpush.bf16.msra.mxu0 0
        %343 = vmatpush.bf16.msra.mxu0 0
        %344 = vmatpush.bf16.msra.mxu0 0
        %345 = vmatpush.bf16.msra.mxu0 %v327
        %346 = vmatpush.bf16.msra.mxu0 %v325
        %347 = vmatpush.bf16.msra.mxu0 %v323
        %348 = vmatpush.bf16.msra.mxu0 %v321
        %349 = vmatmul.bf16.gmra.mxu0 %v339
        %v350 = vpop.f32.mrf.mxu0
        %v351 = vadd.f32 %v293, %v350
        %v352 = vpop.f32.mrf.mxu0
        %353 = vdwg.mxu0
        %354 = vmatpush.bf16.msra.mxu0 0
        %355 = vmatpush.bf16.msra.mxu0 0
        %356 = vmatpush.bf16.msra.mxu0 0
        %357 = vmatpush.bf16.msra.mxu0 0
        %358 = vmatpush.bf16.msra.mxu0 %v328
        %359 = vmatpush.bf16.msra.mxu0 %v326
        %360 = vmatpush.bf16.msra.mxu0 %v324
        %361 = vmatpush.bf16.msra.mxu0 %v322
        %362 = vmatmul.bf16.gmra.mxu0 %v339
        %v363 = vpop.f32.mrf.mxu0
        %v364 = vadd.f32 %v294, %v363
        %v365 = vpop.f32.mrf.mxu0
        %366 = vdwg.mxu0
        %v367 = vpack.c.bf16 %v351, %v351
        %v368 = vmul.f32 %v351, %v237
        %v369 = vpack.c.bf16 %v368, %v368
        %371 = vrot.lane.b32.xlu0 %v367, 64
        %v372 = vpop.permute.xlu0 %371
        %v374 = vsel %vm337, %v369, 0
        %v377 = vsel %vm337, %v372, 0
        %379 = vmatpush.bf16.xpose.msra.mxu0 0
        %380 = vmatpush.bf16.xpose.msra.mxu0 0
        %381 = vmatpush.bf16.xpose.msra.mxu0 0
        %382 = vmatpush.bf16.xpose.msra.mxu0 0
        %383 = vmatpush.bf16.xpose.msra.mxu0 0
        %384 = vmatpush.bf16.xpose.msra.mxu0 0
        %385 = vmatpush.bf16.xpose.msra.mxu0 0
        %386 = vmatpush.bf16.xpose.msra.mxu0 %v377
        %387 = vmatmul.bf16.gmra.mxu0 %v374
        %v388 = vpop.f32.mrf.mxu0
        %v389 = vadd.f32 0.0, %v388
        %v390 = vpop.f32.mrf.mxu0
        %391 = vdwg.mxu0
        %v392 = vmul.f32 %v389, 0.17677669
        %vm393 = vcmask 64512
        %v394 = vsel %vm393, %v392, -inf
        %395 = vmax.xlane.f32.xlu0 %v394
        %v396 = vpop.xlane.xlu0 %395
        %v397 = vsub.f32 %v392, %v396
        %v398 = vmul.f32 %v397, 1.442695
        %v399 = vpow.pop %v398
        %v400 = vsel %vm393, %v399, 0.0
        %401 = vadd.xlane.f32.xlu0 %v400
        %v402 = vpop.xlane.xlu0 %401
        %v403 = vrcp.pop %v402
        %v404 = vmul.f32 %v399, %v403
        %v405 = vpack.c.bf16 %v404, %v404
        %v406 = vmul.f32 %v364, %v237
        %v407 = vpack.c.bf16 %v406, %v406
        %v408 = vmul.f32 %v351, %v242
        %v409 = vpack.c.bf16 %v408, %v408
        %v411 = vsel %vm337, %v409, 0
        %413 = vmatpush.bf16.xpose.msra.mxu0 0
        %414 = vmatpush.bf16.xpose.msra.mxu0 0
        %415 = vmatpush.bf16.xpose.msra.mxu0 0
        %416 = vmatpush.bf16.xpose.msra.mxu0 0
        %417 = vmatpush.bf16.xpose.msra.mxu0 0
        %418 = vmatpush.bf16.xpose.msra.mxu0 0
        %419 = vmatpush.bf16.xpose.msra.mxu0 0
        %420 = vmatpush.bf16.xpose.msra.mxu0 %v377
        %421 = vmatmul.bf16.gmra.mxu0 %v411
        %v422 = vpop.f32.mrf.mxu0
        %v423 = vadd.f32 0.0, %v422
        %v424 = vpop.f32.mrf.mxu0
        %425 = vdwg.mxu0
        %v426 = vmul.f32 %v423, 0.17677669
        %v427 = vsel %vm393, %v426, -inf
        %428 = vmax.xlane.f32.xlu0 %v427
        %v429 = vpop.xlane.xlu0 %428
        %v430 = vsub.f32 %v426, %v429
        %v431 = vmul.f32 %v430, 1.442695
        %v432 = vpow.pop %v431
        %v433 = vsel %vm393, %v432, 0.0
        %434 = vadd.xlane.f32.xlu0 %v433
        %v435 = vpop.xlane.xlu0 %434
        %v436 = vrcp.pop %v435
        %v437 = vmul.f32 %v432, %v436
        %v438 = vpack.c.bf16 %v437, %v437
        %v439 = vmul.f32 %v364, %v242
        %v440 = vpack.c.bf16 %v439, %v439
        %v442 = vsel %vm393, %v438, 0
        %vm444 = vcmask 1043456
        %v446 = vsel %vm444, %v440, 0
        %448 = vmatpush.bf16.msra.mxu0 0
        %449 = vmatpush.bf16.msra.mxu0 0
        %450 = vmatpush.bf16.msra.mxu0 0
        %451 = vmatpush.bf16.msra.mxu0 0
        %452 = vmatpush.bf16.msra.mxu0 0
        %453 = vmatpush.bf16.msra.mxu0 0
        %454 = vmatpush.bf16.msra.mxu0 0
        %455 = vmatpush.bf16.msra.mxu0 %v446
        %456 = vmatmul.bf16.gmra.mxu0 %v442
        %v457 = vpop.f32.mrf.mxu0
        %v458 = vadd.f32 0.0, %v457
        %v459 = vpop.f32.mrf.mxu0
        %460 = vdwg.mxu0
        %v462 = vsel %vm393, %v405, 0
        %v465 = vsel %vm444, %v407, 0
        %467 = vmatpush.bf16.msra.mxu0 0
        %468 = vmatpush.bf16.msra.mxu0 0
        %469 = vmatpush.bf16.msra.mxu0 0
        %470 = vmatpush.bf16.msra.mxu0 0
        %471 = vmatpush.bf16.msra.mxu0 0
        %472 = vmatpush.bf16.msra.mxu0 0
        %473 = vmatpush.bf16.msra.mxu0 0
        %474 = vmatpush.bf16.msra.mxu0 %v465
        %475 = vmatmul.bf16.gmra.mxu0 %v462
        %v476 = vpop.f32.mrf.mxu0
        %v477 = vadd.f32 %v458, %v476
        %v478 = vpop.f32.mrf.mxu0
        %479 = vdwg.mxu0
        %v480 = vpack.c.bf16 %v477, %v477
        %v489 = vunpack.c.l.b16 %v251
        %v490 = vunpack.c.l.b16 %v252
        %v491 = vunpack.c.l.b16 %v253
        %v492 = vunpack.c.l.b16 %v254
        %v493 = vunpack.c.l.b16 %v255
        %v494 = vunpack.c.l.b16 %v256
        %v495 = vunpack.c.l.b16 %v257
        %v496 = vunpack.c.l.b16 %v258
        %v497 = vpack.c.b16 %v490, %v489
        %v498 = vpack.c.b16 %v492, %v491
        %v499 = vpack.c.b16 %v494, %v493
        %v500 = vpack.c.b16 %v496, %v495
        %v506 = vsel %vm337, %v480, 0
        %508 = vmatpush.bf16.msra.mxu0 0
        %509 = vmatpush.bf16.msra.mxu0 0
        %510 = vmatpush.bf16.msra.mxu0 0
        %511 = vmatpush.bf16.msra.mxu0 0
        %512 = vmatpush.bf16.msra.mxu0 %v500
        %513 = vmatpush.bf16.msra.mxu0 %v499
        %514 = vmatpush.bf16.msra.mxu0 %v498
        %515 = vmatpush.bf16.msra.mxu0 %v497
        %516 = vmatmul.bf16.gmra.mxu0 %v506
        %v517 = vpop.f32.mrf.mxu0
        %v518 = vadd.f32 %v285, %v517
        %v519 = vpop.f32.mrf.mxu0
        %520 = vdwg.mxu0
        %v521 = vadd.f32 %v230, %v518
        %v522 = vsel %vm337, %v521, 0.0
        %523 = vadd.xlane.f32.xlu0 %v522
        %v524 = vpop.xlane.xlu0 %523
        %v525 = vrcp.pop 64.0
        %v526 = vmul.f32 64.0, %v525
        %v527 = vsub.f32 1.0, %v526
        %v528 = vmul.f32 %v525, %v527
        %v529 = vadd.f32 %v525, %v528
        %vm530 = vweird.f32 %v525
        %v531 = vsel %vm530, %v525, %v529
        %v532 = vmul.f32 %v524, %v531
        %v533 = vsub.f32 %v521, %v532
        %v534 = vmul.f32 %v533, %v533
        %v535 = vsel %vm337, %v534, 0.0
        %536 = vadd.xlane.f32.xlu0 %v535
        %v537 = vpop.xlane.xlu0 %536
        %v538 = vmul.f32 %v537, %v531
        %v539 = vadd.f32 %v538, 1e-05
        %v540 = vrsqrt.pop %v539
        %v541 = vmul.f32 %v540, %v539
        %v542 = vmul.f32 %v541, %v540
        %v543 = vmul.f32 0.5, %v542
        %v544 = vsub.f32 1.5, %v543
        %v545 = vmul.f32 %v540, %v544
        %vm546 = vweird.f32 %v539
        %vm547 = vweird.f32 %v540
        %vm548 = vmor %vm546, %vm547
        %v549 = vsel %vm548, %v540, %v545
        %v550 = vmul.f32 %v533, %v549
        %v551 = vmul.f32 %v550, %v286
        %v552 = vadd.f32 %v551, %v287
        %v553 = vpack.c.bf16 %v552, %v552
        %v562 = vunpack.c.l.b16 %v259
        %v563 = vunpack.c.l.b16 %v260
        %v564 = vunpack.c.l.b16 %v261
        %v565 = vunpack.c.l.b16 %v262
        %v566 = vunpack.c.l.b16 %v263
        %v567 = vunpack.c.l.b16 %v264
        %v568 = vunpack.c.l.b16 %v265
        %v569 = vunpack.c.l.b16 %v266
        %v570 = vpack.c.b16 %v563, %v562
        %v571 = vpack.c.b16 %v565, %v564
        %v572 = vpack.c.b16 %v567, %v566
        %v573 = vpack.c.b16 %v569, %v568
        %v579 = vsel %vm337, %v553, 0
        %581 = vmatpush.bf16.msra.mxu0 0
        %582 = vmatpush.bf16.msra.mxu0 0
        %583 = vmatpush.bf16.msra.mxu0 0
        %584 = vmatpush.bf16.msra.mxu0 0
        %585 = vmatpush.bf16.msra.mxu0 %v573
        %586 = vmatpush.bf16.msra.mxu0 %v572
        %587 = vmatpush.bf16.msra.mxu0 %v571
        %588 = vmatpush.bf16.msra.mxu0 %v570
        %589 = vmatmul.bf16.gmra.mxu0 %v579
        %v590 = vpop.f32.mrf.mxu0
        %v591 = vadd.f32 %v284, %v590
        %v592 = vpop.f32.mrf.mxu0
        %593 = vdwg.mxu0
        %v594 = vmul.f32 %v591, 0.5
        %v595 = vmul.f32 %v591, 0.044715
        %v596 = vmul.f32 %v595, %v591
        %v597 = vmul.f32 %v596, %v591
        %v598 = vadd.f32 %v591, %v597
        %v599 = vmul.f32 %v598, 0.7978846
        %v600 = vtanh.pop %v599
        %v601 = vadd.f32 %v600, 1.0
        %v602 = vmul.f32 %v594, %v601
        %v603 = vpack.c.bf16 %v602, %v602
        %v620 = vunpack.c.l.b16 %v267
        %v621 = vunpack.c.l.b16 %v268
        %v622 = vunpack.c.l.b16 %v269
        %v623 = vunpack.c.l.b16 %v270
        %v624 = vunpack.c.l.b16 %v271
        %v625 = vunpack.c.l.b16 %v272
        %v626 = vunpack.c.l.b16 %v273
        %v627 = vunpack.c.l.b16 %v274
        %v628 = vunpack.c.l.b16 %v275
        %v629 = vunpack.c.l.b16 %v276
        %v630 = vunpack.c.l.b16 %v277
        %v631 = vunpack.c.l.b16 %v278
        %v632 = vunpack.c.l.b16 %v279
        %v633 = vunpack.c.l.b16 %v280
        %v634 = vunpack.c.l.b16 %v281
        %v635 = vunpack.c.l.b16 %v282
        %v636 = vpack.c.b16 %v621, %v620
        %v637 = vpack.c.b16 %v623, %v622
        %v638 = vpack.c.b16 %v625, %v624
        %v639 = vpack.c.b16 %v627, %v626
        %v640 = vpack.c.b16 %v629, %v628
        %v641 = vpack.c.b16 %v631, %v630
        %v642 = vpack.c.b16 %v633, %v632
        %v643 = vpack.c.b16 %v635, %v634
        %652 = vmatpush.bf16.msra.mxu0 %v643
        %653 = vmatpush.bf16.msra.mxu0 %v642
        %654 = vmatpush.bf16.msra.mxu0 %v641
        %655 = vmatpush.bf16.msra.mxu0 %v640
        %656 = vmatpush.bf16.msra.mxu0 %v639
        %657 = vmatpush.bf16.msra.mxu0 %v638
        %658 = vmatpush.bf16.msra.mxu0 %v637
        %659 = vmatpush.bf16.msra.mxu0 %v636
        %660 = vmatmul.bf16.gmra.mxu0 %v603
        %v661 = vpop.f32.mrf.mxu0
        %v662 = vadd.f32 %v288, %v661
        %v663 = vpop.f32.mrf.mxu0
        %664 = vdwg.mxu0
        %v665 = vadd.f32 %v552, %v662
        %v666 = vsel %vm337, %v665, 0.0
        %667 = vadd.xlane.f32.xlu0 %v666
        %v668 = vpop.xlane.xlu0 %667
        %v669 = vmul.f32 %v668, %v531
        %v670 = vsub.f32 %v665, %v669
        %v671 = vmul.f32 %v670, %v670
        %v672 = vsel %vm337, %v671, 0.0
        %673 = vadd.xlane.f32.xlu0 %v672
        %v674 = vpop.xlane.xlu0 %673
        %v675 = vmul.f32 %v674, %v531
        %v676 = vadd.f32 %v675, 1e-05
        %v677 = vrsqrt.pop %v676
        %v678 = vmul.f32 %v677, %v676
        %v679 = vmul.f32 %v678, %v677
        %v680 = vmul.f32 0.5, %v679
        %v681 = vsub.f32 1.5, %v680
        %v682 = vmul.f32 %v677, %v681
        %vm683 = vweird.f32 %v676
        %vm684 = vweird.f32 %v677
        %vm685 = vmor %vm683, %vm684
        %v686 = vsel %vm685, %v677, %v682
        %v687 = vmul.f32 %v670, %v686
        %v688 = vmul.f32 %v687, %v289
        %v689 = vadd.f32 %v688, %v290
        %s690 = scalar_lea.vmem %s2, 320
        %v691 = vld [vmem:[%s690] sm:$0xff]
        %v692 = vld [vmem:[%s690 + $0x8] sm:$0xff]
        %v693 = vld [vmem:[%s690 + $0x10] sm:$0xff]
        %v694 = vld [vmem:[%s690 + $0x18] sm:$0xff]
        %v695 = vld [vmem:[%s690 + $0x20] sm:$0xff]
        %v696 = vld [vmem:[%s690 + $0x28] sm:$0xff]
        %v697 = vld [vmem:[%s690 + $0x30] sm:$0xff]
        %v698 = vld [vmem:[%s690 + $0x38] sm:$0xff]
        %v699 = vld [vmem:[%s690 + $0x40] sm:$0xf]
        %v700 = vld [vmem:[%s690 + $0x48] sm:$0xf]
        %v701 = vld [vmem:[%s690 + $0x50] sm:$0xf]
        %v702 = vld [vmem:[%s690 + $0x58] sm:$0xf]
        %v703 = vld [vmem:[%s690 + $0x60] sm:$0xf]
        %v704 = vld [vmem:[%s690 + $0x68] sm:$0xf]
        %v705 = vld [vmem:[%s690 + $0x70] sm:$0xf]
        %v706 = vld [vmem:[%s690 + $0x78] sm:$0xf]
        %v707 = vld [vmem:[%s690 + $0x80] sm:$0xf]
        %v708 = vld [vmem:[%s690 + $0x88] sm:$0xf]
        %v709 = vld [vmem:[%s690 + $0x90] sm:$0xf]
        %v710 = vld [vmem:[%s690 + $0x98] sm:$0xf]
        %v711 = vld [vmem:[%s690 + $0xa0] sm:$0xf]
        %v712 = vld [vmem:[%s690 + $0xa8] sm:$0xf]
        %v713 = vld [vmem:[%s690 + $0xb0] sm:$0xf]
        %v714 = vld [vmem:[%s690 + $0xb8] sm:$0xf]
        %v715 = vld [vmem:[%s690 + $0xc0] sm:$0xf]
        %v716 = vld [vmem:[%s690 + $0xc8] sm:$0xf]
        %v717 = vld [vmem:[%s690 + $0xd0] sm:$0xf]
        %v718 = vld [vmem:[%s690 + $0xd8] sm:$0xf]
        %v719 = vld [vmem:[%s690 + $0xe0] sm:$0xf]
        %v720 = vld [vmem:[%s690 + $0xe8] sm:$0xf]
        %v721 = vld [vmem:[%s690 + $0xf0] sm:$0xf]
        %v722 = vld [vmem:[%s690 + $0xf8] sm:$0xf]
        %v723 = vld [vmem:[%s690 + $0x100] sm:$0xf]
        %v724 = vld [vmem:[%s690 + $0x108] sm:$0xf]
        %v725 = vld [vmem:[%s690 + $0x110] sm:$0xf]
        %v726 = vld [vmem:[%s690 + $0x118] sm:$0xf]
        %v727 = vld [vmem:[%s690 + $0x120] sm:$0xf]
        %v728 = vld [vmem:[%s690 + $0x128] sm:$0xf]
        %v729 = vld [vmem:[%s690 + $0x130] sm:$0xf]
        %v730 = vld [vmem:[%s690 + $0x138] sm:$0xf]
        %s731 = scalar_lea.vmem %s3, 16
        %v732 = vld [vmem:[%s731] ss:$8 sm:$0x3]
        %v733 = vld [vmem:[%s731 + $0x1] ss:$0 sm:$0xff]
        %v734 = vld [vmem:[%s731 + $0x2] ss:$0 sm:$0xff]
        %v735 = vld [vmem:[%s731 + $0x3] ss:$0 sm:$0xff]
        %v736 = vld [vmem:[%s731 + $0x4] ss:$0 sm:$0xff]
        %v737 = vld [vmem:[%s731 + $0x5] ss:$0 sm:$0xff]
        %v738 = vld [vmem:[%s731 + $0x6] ss:$0 sm:$0xff]
        %v739 = vld [vmem:[%s731 + $0x7] ss:$0 sm:$0xff]
        %v740 = vpack.c.bf16 %v689, %v689
        %v742 = vperm.slane %v732, 0
        %v743 = vperm.slane %v732, 1
        %v754 = vunpack.c.l.b16 %v691
        %v755 = vunpack.c.h.b16 %v691
        %v756 = vunpack.c.l.b16 %v692
        %v757 = vunpack.c.h.b16 %v692
        %v758 = vunpack.c.l.b16 %v693
        %v759 = vunpack.c.h.b16 %v693
        %v760 = vunpack.c.l.b16 %v694
        %v761 = vunpack.c.h.b16 %v694
        %v762 = vunpack.c.l.b16 %v695
        %v763 = vunpack.c.h.b16 %v695
        %v764 = vunpack.c.l.b16 %v696
        %v765 = vunpack.c.h.b16 %v696
        %v766 = vunpack.c.l.b16 %v697
        %v767 = vunpack.c.h.b16 %v697
        %v768 = vunpack.c.l.b16 %v698
        %v769 = vunpack.c.h.b16 %v698
        %v770 = vpack.c.b16 %v756, %v754
        %v771 = vpack.c.b16 %v757, %v755
        %v772 = vpack.c.b16 %v760, %v758
        %v773 = vpack.c.b16 %v761, %v759
        %v774 = vpack.c.b16 %v764, %v762
        %v775 = vpack.c.b16 %v765, %v763
        %v776 = vpack.c.b16 %v768, %v766
        %v777 = vpack.c.b16 %v769, %v767
        %v787 = vsel %vm337, %v740, 0
        %789 = vmatpush.bf16.msra.mxu0 0
        %790 = vmatpush.bf16.msra.mxu0 0
        %791 = vmatpush.bf16.msra.mxu0 0
        %792 = vmatpush.bf16.msra.mxu0 0
        %793 = vmatpush.bf16.msra.mxu0 %v776
        %794 = vmatpush.bf16.msra.mxu0 %v774
        %795 = vmatpush.bf16.msra.mxu0 %v772
        %796 = vmatpush.bf16.msra.mxu0 %v770
        %797 = vmatmul.bf16.gmra.mxu0 %v787
        %v798 = vpop.f32.mrf.mxu0
        %v799 = vadd.f32 %v742, %v798
        %v800 = vpop.f32.mrf.mxu0
        %801 = vdwg.mxu0
        %802 = vmatpush.bf16.msra.mxu0 0
        %803 = vmatpush.bf16.msra.mxu0 0
        %804 = vmatpush.bf16.msra.mxu0 0
        %805 = vmatpush.bf16.msra.mxu0 0
        %806 = vmatpush.bf16.msra.mxu0 %v777
        %807 = vmatpush.bf16.msra.mxu0 %v775
        %808 = vmatpush.bf16.msra.mxu0 %v773
        %809 = vmatpush.bf16.msra.mxu0 %v771
        %810 = vmatmul.bf16.gmra.mxu0 %v787
        %v811 = vpop.f32.mrf.mxu0
        %v812 = vadd.f32 %v743, %v811
        %v813 = vpop.f32.mrf.mxu0
        %814 = vdwg.mxu0
        %v815 = vpack.c.bf16 %v799, %v799
        %v816 = vmul.f32 %v799, %v237
        %v817 = vpack.c.bf16 %v816, %v816
        %819 = vrot.lane.b32.xlu0 %v815, 64
        %v820 = vpop.permute.xlu0 %819
        %v822 = vsel %vm337, %v817, 0
        %v825 = vsel %vm337, %v820, 0
        %827 = vmatpush.bf16.xpose.msra.mxu0 0
        %828 = vmatpush.bf16.xpose.msra.mxu0 0
        %829 = vmatpush.bf16.xpose.msra.mxu0 0
        %830 = vmatpush.bf16.xpose.msra.mxu0 0
        %831 = vmatpush.bf16.xpose.msra.mxu0 0
        %832 = vmatpush.bf16.xpose.msra.mxu0 0
        %833 = vmatpush.bf16.xpose.msra.mxu0 0
        %834 = vmatpush.bf16.xpose.msra.mxu0 %v825
        %835 = vmatmul.bf16.gmra.mxu0 %v822
        %v836 = vpop.f32.mrf.mxu0
        %v837 = vadd.f32 0.0, %v836
        %v838 = vpop.f32.mrf.mxu0
        %839 = vdwg.mxu0
        %v840 = vmul.f32 %v837, 0.17677669
        %v841 = vsel %vm393, %v840, -inf
        %842 = vmax.xlane.f32.xlu0 %v841
        %v843 = vpop.xlane.xlu0 %842
        %v844 = vsub.f32 %v840, %v843
        %v845 = vmul.f32 %v844, 1.442695
        %v846 = vpow.pop %v845
        %v847 = vsel %vm393, %v846, 0.0
        %848 = vadd.xlane.f32.xlu0 %v847
        %v849 = vpop.xlane.xlu0 %848
        %v850 = vrcp.pop %v849
        %v851 = vmul.f32 %v846, %v850
        %v852 = vpack.c.bf16 %v851, %v851
        %v853 = vmul.f32 %v812, %v237
        %v854 = vpack.c.bf16 %v853, %v853
        %v855 = vmul.f32 %v799, %v242
        %v856 = vpack.c.bf16 %v855, %v855
        %v858 = vsel %vm337, %v856, 0
        %860 = vmatpush.bf16.xpose.msra.mxu0 0
        %861 = vmatpush.bf16.xpose.msra.mxu0 0
        %862 = vmatpush.bf16.xpose.msra.mxu0 0
        %863 = vmatpush.bf16.xpose.msra.mxu0 0
        %864 = vmatpush.bf16.xpose.msra.mxu0 0
        %865 = vmatpush.bf16.xpose.msra.mxu0 0
        %866 = vmatpush.bf16.xpose.msra.mxu0 0
        %867 = vmatpush.bf16.xpose.msra.mxu0 %v825
        %868 = vmatmul.bf16.gmra.mxu0 %v858
        %v869 = vpop.f32.mrf.mxu0
        %v870 = vadd.f32 0.0, %v869
        %v871 = vpop.f32.mrf.mxu0
        %872 = vdwg.mxu0
        %v873 = vmul.f32 %v870, 0.17677669
        %v874 = vsel %vm393, %v873, -inf
        %875 = vmax.xlane.f32.xlu0 %v874
        %v876 = vpop.xlane.xlu0 %875
        %v877 = vsub.f32 %v873, %v876
        %v878 = vmul.f32 %v877, 1.442695
        %v879 = vpow.pop %v878
        %v880 = vsel %vm393, %v879, 0.0
        %881 = vadd.xlane.f32.xlu0 %v880
        %v882 = vpop.xlane.xlu0 %881
        %v883 = vrcp.pop %v882
        %v884 = vmul.f32 %v879, %v883
        %v885 = vpack.c.bf16 %v884, %v884
        %v886 = vmul.f32 %v812, %v242
        %v887 = vpack.c.bf16 %v886, %v886
        %v889 = vsel %vm393, %v885, 0
        %v892 = vsel %vm444, %v887, 0
        %894 = vmatpush.bf16.msra.mxu0 0
        %895 = vmatpush.bf16.msra.mxu0 0
        %896 = vmatpush.bf16.msra.mxu0 0
        %897 = vmatpush.bf16.msra.mxu0 0
        %898 = vmatpush.bf16.msra.mxu0 0
        %899 = vmatpush.bf16.msra.mxu0 0
        %900 = vmatpush.bf16.msra.mxu0 0
        %901 = vmatpush.bf16.msra.mxu0 %v892
        %902 = vmatmul.bf16.gmra.mxu0 %v889
        %v903 = vpop.f32.mrf.mxu0
        %v904 = vadd.f32 0.0, %v903
        %v905 = vpop.f32.mrf.mxu0
        %906 = vdwg.mxu0
        %v908 = vsel %vm393, %v852, 0
        %v911 = vsel %vm444, %v854, 0
        %913 = vmatpush.bf16.msra.mxu0 0
        %914 = vmatpush.bf16.msra.mxu0 0
        %915 = vmatpush.bf16.msra.mxu0 0
        %916 = vmatpush.bf16.msra.mxu0 0
        %917 = vmatpush.bf16.msra.mxu0 0
        %918 = vmatpush.bf16.msra.mxu0 0
        %919 = vmatpush.bf16.msra.mxu0 0
        %920 = vmatpush.bf16.msra.mxu0 %v911
        %921 = vmatmul.bf16.gmra.mxu0 %v908
        %v922 = vpop.f32.mrf.mxu0
        %v923 = vadd.f32 %v904, %v922
        %v924 = vpop.f32.mrf.mxu0
        %925 = vdwg.mxu0
        %v926 = vpack.c.bf16 %v923, %v923
        %v935 = vunpack.c.l.b16 %v699
        %v936 = vunpack.c.l.b16 %v700
        %v937 = vunpack.c.l.b16 %v701
        %v938 = vunpack.c.l.b16 %v702
        %v939 = vunpack.c.l.b16 %v703
        %v940 = vunpack.c.l.b16 %v704
        %v941 = vunpack.c.l.b16 %v705
        %v942 = vunpack.c.l.b16 %v706
        %v943 = vpack.c.b16 %v936, %v935
        %v944 = vpack.c.b16 %v938, %v937
        %v945 = vpack.c.b16 %v940, %v939
        %v946 = vpack.c.b16 %v942, %v941
        %v952 = vsel %vm337, %v926, 0
        %954 = vmatpush.bf16.msra.mxu0 0
        %955 = vmatpush.bf16.msra.mxu0 0
        %956 = vmatpush.bf16.msra.mxu0 0
        %957 = vmatpush.bf16.msra.mxu0 0
        %958 = vmatpush.bf16.msra.mxu0 %v946
        %959 = vmatpush.bf16.msra.mxu0 %v945
        %960 = vmatpush.bf16.msra.mxu0 %v944
        %961 = vmatpush.bf16.msra.mxu0 %v943
        %962 = vmatmul.bf16.gmra.mxu0 %v952
        %v963 = vpop.f32.mrf.mxu0
        %v964 = vadd.f32 %v734, %v963
        %v965 = vpop.f32.mrf.mxu0
        %966 = vdwg.mxu0
        %v967 = vadd.f32 %v689, %v964
        %v968 = vsel %vm337, %v967, 0.0
        %969 = vadd.xlane.f32.xlu0 %v968
        %v970 = vpop.xlane.xlu0 %969
        %v971 = vmul.f32 %v970, %v531
        %v972 = vsub.f32 %v967, %v971
        %v973 = vmul.f32 %v972, %v972
        %v974 = vsel %vm337, %v973, 0.0
        %975 = vadd.xlane.f32.xlu0 %v974
        %v976 = vpop.xlane.xlu0 %975
        %v977 = vmul.f32 %v976, %v531
        %v978 = vadd.f32 %v977, 1e-05
        %v979 = vrsqrt.pop %v978
        %v980 = vmul.f32 %v979, %v978
        %v981 = vmul.f32 %v980, %v979
        %v982 = vmul.f32 0.5, %v981
        %v983 = vsub.f32 1.5, %v982
        %v984 = vmul.f32 %v979, %v983
        %vm985 = vweird.f32 %v978
        %vm986 = vweird.f32 %v979
        %vm987 = vmor %vm985, %vm986
        %v988 = vsel %vm987, %v979, %v984
        %v989 = vmul.f32 %v972, %v988
        %v990 = vmul.f32 %v989, %v735
        %v991 = vadd.f32 %v990, %v736
        %v992 = vpack.c.bf16 %v991, %v991
        %v1001 = vunpack.c.l.b16 %v707
        %v1002 = vunpack.c.l.b16 %v708
        %v1003 = vunpack.c.l.b16 %v709
        %v1004 = vunpack.c.l.b16 %v710
        %v1005 = vunpack.c.l.b16 %v711
        %v1006 = vunpack.c.l.b16 %v712
        %v1007 = vunpack.c.l.b16 %v713
        %v1008 = vunpack.c.l.b16 %v714
        %v1009 = vpack.c.b16 %v1002, %v1001
        %v1010 = vpack.c.b16 %v1004, %v1003
        %v1011 = vpack.c.b16 %v1006, %v1005
        %v1012 = vpack.c.b16 %v1008, %v1007
        %v1018 = vsel %vm337, %v992, 0
        %1020 = vmatpush.bf16.msra.mxu0 0
        %1021 = vmatpush.bf16.msra.mxu0 0
        %1022 = vmatpush.bf16.msra.mxu0 0
        %1023 = vmatpush.bf16.msra.mxu0 0
        %1024 = vmatpush.bf16.msra.mxu0 %v1012
        %1025 = vmatpush.bf16.msra.mxu0 %v1011
        %1026 = vmatpush.bf16.msra.mxu0 %v1010
        %1027 = vmatpush.bf16.msra.mxu0 %v1009
        %1028 = vmatmul.bf16.gmra.mxu0 %v1018
        %v1029 = vpop.f32.mrf.mxu0
        %v1030 = vadd.f32 %v733, %v1029
        %v1031 = vpop.f32.mrf.mxu0
        %1032 = vdwg.mxu0
        %v1033 = vmul.f32 %v1030, 0.5
        %v1034 = vmul.f32 %v1030, 0.044715
        %v1035 = vmul.f32 %v1034, %v1030
        %v1036 = vmul.f32 %v1035, %v1030
        %v1037 = vadd.f32 %v1030, %v1036
        %v1038 = vmul.f32 %v1037, 0.7978846
        %v1039 = vtanh.pop %v1038
        %v1040 = vadd.f32 %v1039, 1.0
        %v1041 = vmul.f32 %v1033, %v1040
        %v1042 = vpack.c.bf16 %v1041, %v1041
        %v1059 = vunpack.c.l.b16 %v715
        %v1060 = vunpack.c.l.b16 %v716
        %v1061 = vunpack.c.l.b16 %v717
        %v1062 = vunpack.c.l.b16 %v718
        %v1063 = vunpack.c.l.b16 %v719
        %v1064 = vunpack.c.l.b16 %v720
        %v1065 = vunpack.c.l.b16 %v721
        %v1066 = vunpack.c.l.b16 %v722
        %v1067 = vunpack.c.l.b16 %v723
        %v1068 = vunpack.c.l.b16 %v724
        %v1069 = vunpack.c.l.b16 %v725
        %v1070 = vunpack.c.l.b16 %v726
        %v1071 = vunpack.c.l.b16 %v727
        %v1072 = vunpack.c.l.b16 %v728
        %v1073 = vunpack.c.l.b16 %v729
        %v1074 = vunpack.c.l.b16 %v730
        %v1075 = vpack.c.b16 %v1060, %v1059
        %v1076 = vpack.c.b16 %v1062, %v1061
        %v1077 = vpack.c.b16 %v1064, %v1063
        %v1078 = vpack.c.b16 %v1066, %v1065
        %v1079 = vpack.c.b16 %v1068, %v1067
        %v1080 = vpack.c.b16 %v1070, %v1069
        %v1081 = vpack.c.b16 %v1072, %v1071
        %v1082 = vpack.c.b16 %v1074, %v1073
        %1091 = vmatpush.bf16.msra.mxu0 %v1082
        %1092 = vmatpush.bf16.msra.mxu0 %v1081
        %1093 = vmatpush.bf16.msra.mxu0 %v1080
        %1094 = vmatpush.bf16.msra.mxu0 %v1079
        %1095 = vmatpush.bf16.msra.mxu0 %v1078
        %1096 = vmatpush.bf16.msra.mxu0 %v1077
        %1097 = vmatpush.bf16.msra.mxu0 %v1076
        %1098 = vmatpush.bf16.msra.mxu0 %v1075
        %1099 = vmatmul.bf16.gmra.mxu0 %v1042
        %v1100 = vpop.f32.mrf.mxu0
        %v1101 = vadd.f32 %v737, %v1100
        %v1102 = vpop.f32.mrf.mxu0
        %1103 = vdwg.mxu0
        %v1104 = vadd.f32 %v991, %v1101
        %v1105 = vsel %vm337, %v1104, 0.0
        %1106 = vadd.xlane.f32.xlu0 %v1105
        %v1107 = vpop.xlane.xlu0 %1106
        %v1108 = vmul.f32 %v1107, %v531
        %v1109 = vsub.f32 %v1104, %v1108
        %v1110 = vmul.f32 %v1109, %v1109
        %v1111 = vsel %vm337, %v1110, 0.0
        %1112 = vadd.xlane.f32.xlu0 %v1111
        %v1113 = vpop.xlane.xlu0 %1112
        %v1114 = vmul.f32 %v1113, %v531
        %v1115 = vadd.f32 %v1114, 1e-05
        %v1116 = vrsqrt.pop %v1115
        %v1117 = vmul.f32 %v1116, %v1115
        %v1118 = vmul.f32 %v1117, %v1116
        %v1119 = vmul.f32 0.5, %v1118
        %v1120 = vsub.f32 1.5, %v1119
        %v1121 = vmul.f32 %v1116, %v1120
        %vm1122 = vweird.f32 %v1115
        %vm1123 = vweird.f32 %v1116
        %vm1124 = vmor %vm1122, %vm1123
        %v1125 = vsel %vm1124, %v1116, %v1121
        %v1126 = vmul.f32 %v1109, %v1125
        %v1127 = vmul.f32 %v1126, %v738
        %v1128 = vadd.f32 %v1127, %v739
        %v1129 = vsel %vm337, %v1128, 0.0
        %v1130 = vrot.slane %v1129, 4
        %v1131 = vadd.f32 %v1129, %v1130
        %v1132 = vrot.slane %v1131, 2
        %v1133 = vadd.f32 %v1131, %v1132
        %v1134 = vrot.slane %v1133, 1
        %v1135 = vadd.f32 %v1133, %v1134
        %v1136 = vrcp.pop 8.0
        %v1137 = vmul.f32 8.0, %v1136
        %v1138 = vsub.f32 1.0, %v1137
        %v1139 = vmul.f32 %v1136, %v1138
        %v1140 = vadd.f32 %v1136, %v1139
        %vm1141 = vweird.f32 %v1136
        %v1142 = vsel %vm1141, %v1136, %v1140
        %v1143 = vmul.f32 %v1135, %v1142
        %v1144 = vld [vmem:[%s4 + $0x8] sm:$0xff]
        %v1145 = vld [vmem:[%s4 + $0x10] sm:$0xff]
        %v1146 = vld [vmem:[%s4 + $0x18] sm:$0xff]
        %v1147 = vld [vmem:[%s4 + $0x20] sm:$0xff]
        %v1148 = vld [vmem:[%s4 + $0x28] sm:$0xff]
        %v1149 = vld [vmem:[%s4 + $0x30] sm:$0xff]
        %v1150 = vld [vmem:[%s4 + $0x38] sm:$0xff]
        %v1151 = vld [vmem:[%s4 + $0x40] sm:$0xff]
        %v1152 = vld [vmem:[%s4 + $0x1] sm:$0x1]
        %v1153 = vld [vmem:[%s4 + $0x48] sm:$0xff]
        %v1154 = vld [vmem:[%s4 + $0x50] sm:$0xff]
        %v1155 = vld [vmem:[%s4 + $0x58] sm:$0xff]
        %v1156 = vld [vmem:[%s4 + $0x60] sm:$0xff]
        %v1157 = vld [vmem:[%s4 + $0x68] sm:$0xff]
        %v1158 = vld [vmem:[%s4 + $0x70] sm:$0xff]
        %v1159 = vld [vmem:[%s4 + $0x78] sm:$0xff]
        %v1160 = vld [vmem:[%s4 + $0x80] sm:$0xff]
        %v1161 = vld [vmem:[%s4 + $0x2] sm:$0x1]
        %v1163 = vsel %vm337, %v1143, 0
        %1165 = vmatpush.msra.mxu0 0.0
        %1166 = vmatpush.msra.mxu0 0.0
        %1167 = vmatpush.msra.mxu0 0.0
        %1168 = vmatpush.msra.mxu0 0.0
        %1169 = vmatpush.msra.mxu0 0.0
        %1170 = vmatpush.msra.mxu0 0.0
        %1171 = vmatpush.msra.mxu0 0.0
        %1172 = vmatpush.msra.mxu0 0.0
        %1173 = vmatpush.msra.mxu0 %v1151
        %1174 = vmatpush.msra.mxu0 %v1150
        %1175 = vmatpush.msra.mxu0 %v1149
        %1176 = vmatpush.msra.mxu0 %v1148
        %1177 = vmatpush.msra.mxu0 %v1147
        %1178 = vmatpush.msra.mxu0 %v1146
        %1179 = vmatpush.msra.mxu0 %v1145
        %1180 = vmatpush.msra.mxu0 %v1144
        %1181 = vmatmul.f32.gmra.mxu0 %v1163
        %v1182 = vpop.f32.mrf.mxu0
        %v1183 = vadd.f32 %v1152, %v1182
        %1184 = vdwg.mxu0
        %v1185 = vmax.f32 %v1183, 0.0
        %v1187 = vsel %vm337, %v1185, 0
        %1189 = vmatpush.msra.mxu0 0.0
        %1190 = vmatpush.msra.mxu0 0.0
        %1191 = vmatpush.msra.mxu0 0.0
        %1192 = vmatpush.msra.mxu0 0.0
        %1193 = vmatpush.msra.mxu0 0.0
        %1194 = vmatpush.msra.mxu0 0.0
        %1195 = vmatpush.msra.mxu0 0.0
        %1196 = vmatpush.msra.mxu0 0.0
        %1197 = vmatpush.msra.mxu0 %v1160
        %1198 = vmatpush.msra.mxu0 %v1159
        %1199 = vmatpush.msra.mxu0 %v1158
        %1200 = vmatpush.msra.mxu0 %v1157
        %1201 = vmatpush.msra.mxu0 %v1156
        %1202 = vmatpush.msra.mxu0 %v1155
        %1203 = vmatpush.msra.mxu0 %v1154
        %1204 = vmatpush.msra.mxu0 %v1153
        %1205 = vmatmul.f32.gmra.mxu0 %v1187
        %v1206 = vpop.f32.mrf.mxu0
        %v1207 = vadd.f32 %v1161, %v1206
        %1208 = vdwg.mxu0
        %vm1209 = vcmask 122880
        %1210 = vst.msk [vmem:[%s214] sm:$0x1] %vm1209, %v1207
        %s1211 = sand.u32 %s137, 1
        %s1212 = scalar_lea.sflag [#allocation3], %s1211
        %s1213 = sand.u32 %s137, 1
        %s1214 = scalar_lea.vmem [#allocation2], %s1213
        // Predicated region
        $region41: #{tpu_custom_call.1} parent=39 // pred_check
          %p1215 = pneg %p147
        $region42: #{tpu_custom_call.1} parent=39 // pred_check_branch
          %1217 = sbr.rel (%p1215) target = $region44
        $region43: #{tpu_custom_call.1} parent=39 // pred_region
          %1219 = vsyncadd %s1212, 0
          %s1220 = scalar_lea.hbm %s5, %s19
          %s1222 = sshll.u32 %s1214, 4
          %s1223 = int_to_ptr.vmem [resolvable:$true] %s1222
          %s1224 = sshll.u32 %s1220, 4
          %s1225 = int_to_ptr.hbm [resolvable:$true] %s1224
          %1227 = dma.vmem_to_hbm [thread:$0]  %s1223, 16, %s1225, %s1212
        $region44: #{tpu_custom_call.1} parent=39 // pred_fallthru
          _
      $region40: #{tpu_custom_call.1} parent=5 // pred_fallthru
        _
      %p1228 = scmp.le.s32.totalorder 2, %s14
      // Predicated region
      $region45: #{tpu_custom_call.1} parent=5 // pred_check
        %p1229 = pneg %p1228
      $region46: #{tpu_custom_call.1} parent=5 // pred_check_branch
        %1231 = sbr.rel (%p1229) target = $region48
      $region47: #{tpu_custom_call.1} parent=5 // pred_region
        %s1232 = ssub.s32 %s14, 2
        // Predicated region
        $region49: #{tpu_custom_call.1} parent=47 // pred_check
          %p1233 = pneg %p153
        $region50: #{tpu_custom_call.1} parent=47 // pred_check_branch
          %1235 = sbr.rel (%p1233) target = $region52
        $region51: #{tpu_custom_call.1} parent=47 // pred_region
          %s1236 = sand.u32 %s138, 1
          %s1237 = scalar_lea.sflag [#allocation3], %s1236
          %s1238 = sand.u32 %s138, 1
          %s1239 = scalar_lea.vmem [#allocation2], %s1238
          %1241 = dma.done %s1237, 16
        $region52: #{tpu_custom_call.1} parent=47 // pred_fallthru
          _
      $region48: #{tpu_custom_call.1} parent=5 // pred_fallthru
        _
    $region6: #{tpu_custom_call.1} parent=1 // loop_footer
      %s18 = sadd.s32 1, %s14
    $region7: #{tpu_custom_call.1} parent=1 // loop_footer_branch
      %13 = sbr.rel target = $region3
    $region8: #{tpu_custom_call.1} parent=1 // loop_exit
      _
    %1242 = vsyncpa [#allocation3], 1
    %s1243 = scalar_lea.sflag [#allocation3], 1
    %1244 = vsyncpa %s1243, 1

</llo_original>
